<compile_context>
chip_gen: v7x
topology: tpu7x:2x2x1
jax: 0.10.0
libtpu: 0.0.40
codegen_flags: <defaults>
</compile_context>

<pallas_src>
import jax
import jax.numpy as jnp
from jax import lax
from jax.experimental import pallas as pl
from jax.experimental.pallas import tpu as pltpu


def _round_up(x, m):
    return ((x + m - 1) // m) * m


def _lstm_seq_kernel(gx_ref, h0_ref, c0_ref, whh_ref, h_out_ref, c_out_ref,
                     h_sc, c_sc):
    """One grid step == one (batch block, time block) of Tb LSTMCell steps.

    gx_ref  : [Tb, Bb, 4*Hp] f32   precomputed x-projection + fused bias
    h0_ref  : [Bb, Hp]              initial hidden state
    c0_ref  : [Bb, Hp]              initial cell state
    whh_ref : [Hp, 4*Hp]    bf16    recurrent weight (resident in VMEM)
    h_out   : [Tb, Bb, Hp]  f32
    c_out   : [Tb, Bb, Hp]  f32
    h_sc/c_sc : [Bb, Hp]    f32     carried across time blocks
    """
    t_blk = pl.program_id(1)

    @pl.when(t_blk == 0)
    def _():
        h_sc[...] = h0_ref[...].astype(jnp.float32)
        c_sc[...] = c0_ref[...].astype(jnp.float32)

    Hp = h_sc.shape[-1]
    Tb = gx_ref.shape[0]
    whh = whh_ref[...]                       # bf16 [Hp, 4Hp]

    def step(tt, carry):
        h, c = carry                         # f32 [Bb, Hp]
        # Recurrent projection only; x-projection and bias were precomputed.
        gates = jnp.dot(h.astype(whh.dtype), whh,
                        preferred_element_type=jnp.float32) + gx_ref[tt]
        i_g = jax.nn.sigmoid(gates[:, 0 * Hp:1 * Hp])
        f_g = jax.nn.sigmoid(gates[:, 1 * Hp:2 * Hp])
        g_g = jnp.tanh(gates[:, 2 * Hp:3 * Hp])
        o_g = jax.nn.sigmoid(gates[:, 3 * Hp:4 * Hp])
        c_new = f_g * c + i_g * g_g
        h_new = o_g * jnp.tanh(c_new)
        h_out_ref[tt] = h_new.astype(h_out_ref.dtype)
        c_out_ref[tt] = c_new.astype(c_out_ref.dtype)
        return h_new, c_new

    h_fin, c_fin = lax.fori_loop(0, Tb, step, (h_sc[...], c_sc[...]),
                                 unroll=True)
    h_sc[...] = h_fin
    c_sc[...] = c_fin


def _pad_gates(a, H, Hp):
    """Pad the 4H gate axis (axis 0) so each (i, f, g, o) block goes H -> Hp."""
    a4 = a.reshape((4, H) + a.shape[1:])
    pad = [(0, 0)] * a4.ndim
    pad[1] = (0, Hp - H)
    return jnp.pad(a4, pad).reshape((4 * Hp,) + a.shape[1:])


def prepare_lstm_params(w_ih, w_hh, b_ih, b_hh, *, lane=128):
    """Hoisted parameter prep (do ONCE, reused for every call).

    w_ih : [4H, E], w_hh : [4H, H], b_ih/b_hh : [4H]  (PyTorch LSTMCell layout,
    gate order i, f, g, o).  Hidden is padded to Hp = round_up(H, 128) so all
    gate slices / outputs are lane-dense; padded gate rows are zero so padded
    lanes of h/c stay inert.

    Returns (w_ih_p [4Hp, E] bf16, w_hh_t [Hp, 4Hp] bf16, bias [4Hp] f32).
    """
    H = w_hh.shape[1]
    Hp = _round_up(H, lane)
    w_ih_p = _pad_gates(w_ih, H, Hp).astype(jnp.bfloat16)            # [4Hp, E]
    w_hh_p = _pad_gates(w_hh, H, Hp)                                 # [4Hp, H]
    w_hh_p = jnp.pad(w_hh_p, ((0, 0), (0, Hp - H)))                  # [4Hp, Hp]
    w_hh_t = jnp.transpose(w_hh_p).astype(jnp.bfloat16)              # [Hp, 4Hp]
    bias = _pad_gates((b_ih + b_hh).astype(jnp.float32), H, Hp)      # [4Hp]
    return w_ih_p, w_hh_t, bias


def language_encoding_lstm_sequence(h0, c0, x_seq, w_ih_p, w_hh_t, bias, *,
                                    time_block=16, max_batch_block=128):
    """Run T LSTMCell steps (one fused pallas_call for the recurrence).

    h0, c0 : [B, H]      x_seq : [T, B, E]
    Returns (h_seq, c_seq), each [T, B, H]  (per-step states).
    """
    T, B, E = x_seq.shape
    H = h0.shape[1]
    Hp = w_hh_t.shape[0]

    # ---- Hoisted input projection: ONE big GEMM over all T*B rows with the
    # fused bias folded in (bf16 operands, f32 accumulation). ----
    gates_x = jnp.einsum(
        "tbe,ge->tbg", x_seq.astype(jnp.bfloat16), w_ih_p,
        preferred_element_type=jnp.float32) + bias                   # [T,B,4Hp]

    # ---- Pad batch to a sublane/block multiple and time to the block size. ----
    B8 = _round_up(B, 8)
    Bb = min(B8, max_batch_block)       # batch rows per grid block (mult of 8)
    Bp = _round_up(B8, Bb)
    Tb = min(T, time_block)             # timesteps per grid step
    Tp = _round_up(T, Tb)

    gates_x = jnp.pad(gates_x, ((0, Tp - T), (0, Bp - B), (0, 0)))
    h0p = jnp.pad(h0.astype(jnp.float32), ((0, Bp - B), (0, Hp - H)))
    c0p = jnp.pad(c0.astype(jnp.float32), ((0, Bp - B), (0, Hp - H)))

    n_b, n_t = Bp // Bb, Tp // Tb

    grid_spec = pltpu.PrefetchScalarGridSpec(
        num_scalar_prefetch=0,
        grid=(n_b, n_t),
        in_specs=[
            pl.BlockSpec((Tb, Bb, 4 * Hp), lambda b, t: (t, b, 0)),  # gates_x
            pl.BlockSpec((Bb, Hp), lambda b, t: (b, 0)),             # h0
            pl.BlockSpec((Bb, Hp), lambda b, t: (b, 0)),             # c0
            pl.BlockSpec((Hp, 4 * Hp), lambda b, t: (0, 0)),         # W_hh^T
        ],
        out_specs=(
            pl.BlockSpec((Tb, Bb, Hp), lambda b, t: (t, b, 0)),      # h_seq
            pl.BlockSpec((Tb, Bb, Hp), lambda b, t: (t, b, 0)),      # c_seq
        ),
        scratch_shapes=[
            pltpu.VMEM((Bb, Hp), jnp.float32),   # h carry
            pltpu.VMEM((Bb, Hp), jnp.float32),   # c carry
        ],
    )

    h_seq, c_seq = pl.pallas_call(
        _lstm_seq_kernel,
        out_shape=(jax.ShapeDtypeStruct((Tp, Bp, Hp), jnp.float32),
                   jax.ShapeDtypeStruct((Tp, Bp, Hp), jnp.float32)),
        grid_spec=grid_spec,
        compiler_params=pltpu.CompilerParams(
            # batch blocks are independent -> parallel; time recurrence stays
            # sequential (h/c carried in scratch) -> arbitrary.
            dimension_semantics=("parallel", "arbitrary"),
            vmem_limit_bytes=64 * 1024 * 1024,
        ),
    )(gates_x, h0p, c0p, w_hh_t)

    return h_seq[:T, :B, :H], c_seq[:T, :B, :H]


def language_encoding_lstm_forward(h, c, prev_words_embedded,
                                   w_ih_p, w_hh_t, bias):
    """Module-equivalent single-step forward (T == 1 of the fused kernel)."""
    h_seq, c_seq = language_encoding_lstm_sequence(
        h, c, prev_words_embedded[None], w_ih_p, w_hh_t, bias)
    return h_seq[0], c_seq[0]


def init_state(batch_size, hidden_size, dtype=jnp.float32):
    """Equivalent of LanguageEncodingLSTM.init_state."""
    return [jnp.zeros((batch_size, hidden_size), dtype),
            jnp.zeros((batch_size, hidden_size), dtype)]


# TODO(synk): enable_fine_tuning (requires_grad toggling) is an autograd
# bookkeeping method with no Pallas forward-pass equivalent.


def _reference_lstm_cell(h, c, x, w_ih, w_hh, b_ih, b_hh):
    """Pure-JAX reference matching torch.nn.LSTMCell semantics (f32)."""
    gates = x @ w_ih.T + b_ih + h @ w_hh.T + b_hh
    H = h.shape[1]
    i = jax.nn.sigmoid(gates[:, 0 * H:1 * H])
    f = jax.nn.sigmoid(gates[:, 1 * H:2 * H])
    g = jnp.tanh(gates[:, 2 * H:3 * H])
    o = jax.nn.sigmoid(gates[:, 3 * H:4 * H])
    c_new = f * c + i * g
    h_new = o * jnp.tanh(c_new)
    return h_new, c_new


if __name__ == "__main__":
    # Small shapes consistent with the module: batch=2, embed=32, hidden=32, T=8.
    B, E, H, T = 2, 32, 32, 8
    key = jax.random.PRNGKey(0)
    k1, k2, k3, k4, k5, k6, k7 = jax.random.split(key, 7)

    scale = 1.0 / jnp.sqrt(H)
    w_ih = jax.random.uniform(k1, (4 * H, E), jnp.float32, -scale, scale)
    w_hh = jax.random.uniform(k2, (4 * H, H), jnp.float32, -scale, scale)
    b_ih = jax.random.uniform(k3, (4 * H,), jnp.float32, -scale, scale)
    b_hh = jax.random.uniform(k4, (4 * H,), jnp.float32, -scale, scale)

    # init_state equivalent exists; use random states to exercise the carries.
    _h_zero, _c_zero = init_state(B, H)
    h0 = jax.random.normal(k5, (B, H), jnp.float32)
    c0 = jax.random.normal(k6, (B, H), jnp.float32)
    x_seq = jax.random.normal(k7, (T, B, E), jnp.float32)

    # Hoisted parameter prep: computed once, reused for every call.
    w_ih_p, w_hh_t, bias = jax.block_until_ready(
        prepare_lstm_params(w_ih, w_hh, b_ih, b_hh))

    seq_fn = jax.jit(language_encoding_lstm_sequence)
    step_fn = jax.jit(language_encoding_lstm_forward)

    # Fused multi-step run: T timesteps in a single pallas_call.
    h_seq, c_seq = jax.block_until_ready(
        seq_fn(h0, c0, x_seq, w_ih_p, w_hh_t, bias))

    # Module-equivalent single-step forward.
    h1, c1 = jax.block_until_ready(
        step_fn(h0, c0, x_seq[0], w_ih_p, w_hh_t, bias))

    # Correctness vs. a pure-JAX f32 LSTMCell reference.  Matmul operands are
    # bf16 (f32 accumulation, f32 cell state), so tolerances are loosened.
    ATOL = RTOL = 5e-2
    ok = True
    h_ref, c_ref = h0, c0
    for t in range(T):
        h_ref, c_ref = _reference_lstm_cell(
            h_ref, c_ref, x_seq[t], w_ih, w_hh, b_ih, b_hh)
        ok &= bool(jnp.allclose(h_seq[t], h_ref, atol=ATOL, rtol=RTOL))
        ok &= bool(jnp.allclose(c_seq[t], c_ref, atol=ATOL, rtol=RTOL))

    h1_ref, c1_ref = _reference_lstm_cell(h0, c0, x_seq[0],
                                          w_ih, w_hh, b_ih, b_hh)
    ok &= bool(jnp.allclose(h1, h1_ref, atol=ATOL, rtol=RTOL))
    ok &= bool(jnp.allclose(c1, c1_ref, atol=ATOL, rtol=RTOL))
    assert ok, "Pallas LSTM does not match the reference LSTMCell"

    print("KERNEL_OK")
</pallas_src>

<mosaic_0001>
module attributes {stable_mosaic.version = 11 : i64} {
  func.func @_lstm_seq_kernel(%arg0: i32, %arg1: i32, %arg2: memref<8x8x512xf32, #tpu.memory_space<vmem>>, %arg3: memref<8x128xf32, #tpu.memory_space<vmem>>, %arg4: memref<8x128xf32, #tpu.memory_space<vmem>>, %arg5: memref<128x512xbf16, #tpu.memory_space<vmem>>, %arg6: memref<8x8x128xf32, #tpu.memory_space<vmem>>, %arg7: memref<8x8x128xf32, #tpu.memory_space<vmem>>, %arg8: memref<8x128xf32, #tpu.memory_space<vmem>>, %arg9: memref<8x128xf32, #tpu.memory_space<vmem>>) attributes {dimension_semantics = [#tpu.dimension_semantics<parallel>, #tpu.dimension_semantics<arbitrary>], iteration_bounds = array<i64: 1, 1>, scalar_prefetch = 0 : i64, scratch_operands = 2 : i64, tpu.core_type = #tpu.core_type<tc>, window_params = [{transform_indices = @transform_0, window_bounds = array<i64: 8, 8, 512>}, {transform_indices = @transform_1, window_bounds = array<i64: 8, 128>}, {transform_indices = @transform_2, window_bounds = array<i64: 8, 128>}, {pipeline_mode = #tpu.pipeline_mode<synchronous>, transform_indices = @transform_3, window_bounds = array<i64: 128, 512>}, {transform_indices = @transform_4, window_bounds = array<i64: 8, 8, 128>}, {transform_indices = @transform_5, window_bounds = array<i64: 8, 8, 128>}]} {
    %c0_i32 = arith.constant 0 : i32
    %0 = arith.cmpi eq, %arg1, %c0_i32 : i32
    %1 = arith.extui %0 : i1 to i32
    %c0_i32_0 = arith.constant 0 : i32
    %2 = arith.cmpi ne, %1, %c0_i32_0 : i32
    scf.if %2 {
      %c0_90 = arith.constant 0 : index
      %c0_91 = arith.constant 0 : index
      %320 = vector.load %arg3[%c0_90, %c0_91] : memref<8x128xf32, #tpu.memory_space<vmem>>, vector<8x128xf32>
      %c0_92 = arith.constant 0 : index
      %c0_93 = arith.constant 0 : index
      %321 = vector.load %arg8[%c0_92, %c0_93] : memref<8x128xf32, #tpu.memory_space<vmem>>, vector<8x128xf32>
      tpu.vector_store %arg8[%c0_92, %c0_93], %320 {strides = array<i32>} : memref<8x128xf32, #tpu.memory_space<vmem>>, vector<8x128xf32>,
      %c0_94 = arith.constant 0 : index
      %c0_95 = arith.constant 0 : index
      %322 = vector.load %arg4[%c0_94, %c0_95] : memref<8x128xf32, #tpu.memory_space<vmem>>, vector<8x128xf32>
      %c0_96 = arith.constant 0 : index
      %c0_97 = arith.constant 0 : index
      %323 = vector.load %arg9[%c0_96, %c0_97] : memref<8x128xf32, #tpu.memory_space<vmem>>, vector<8x128xf32>
      tpu.vector_store %arg9[%c0_96, %c0_97], %322 {strides = array<i32>} : memref<8x128xf32, #tpu.memory_space<vmem>>, vector<8x128xf32>,
    } else {
    }
    %c0 = arith.constant 0 : index
    %c0_1 = arith.constant 0 : index
    %3 = vector.load %arg5[%c0, %c0_1] : memref<128x512xbf16, #tpu.memory_space<vmem>>, vector<128x512xbf16>
    %c0_2 = arith.constant 0 : index
    %c0_3 = arith.constant 0 : index
    %4 = vector.load %arg8[%c0_2, %c0_3] : memref<8x128xf32, #tpu.memory_space<vmem>>, vector<8x128xf32>
    %c0_4 = arith.constant 0 : index
    %c0_5 = arith.constant 0 : index
    %5 = vector.load %arg9[%c0_4, %c0_5] : memref<8x128xf32, #tpu.memory_space<vmem>>, vector<8x128xf32>
    %c0_i32_6 = arith.constant 0 : i32
    %6 = arith.truncf %4 : vector<8x128xf32> to vector<8x128xbf16>
    %cst = arith.constant dense<0.000000e+00> : vector<8x512xf32>
    %7 = tpu.matmul %6, %3, %cst {dimension_numbers = #tpu.dot_dimension_numbers<[1], [0], [0], [1], [0, 0, 1, 1], [], []>} : vector<8x128xbf16>, vector<128x512xbf16>, vector<8x512xf32> -> vector<8x512xf32>
    %8 = arith.index_cast %c0_i32_6 : i32 to index
    %c0_7 = arith.constant 0 : index
    %c0_8 = arith.constant 0 : index
    %9 = vector.load %arg2[%8, %c0_7, %c0_8] : memref<8x8x512xf32, #tpu.memory_space<vmem>>, vector<1x8x512xf32>
    %10 = vector.shape_cast %9 : vector<1x8x512xf32> to vector<8x512xf32>
    %11 = arith.addf %7, %10 : vector<8x512xf32>
    %12 = vector.extract_strided_slice %11 {offsets = [0, 0], sizes = [8, 128], strides = [1, 1]} : vector<8x512xf32> to vector<8x128xf32>
    %13 = arith.negf %12 : vector<8x128xf32>
    %14 = math.exp %13 : vector<8x128xf32>
    %cst_9 = arith.constant 1.000000e+00 : f32
    %15 = vector.broadcast %cst_9 : f32 to vector<8x128xf32>
    %16 = arith.addf %15, %14 : vector<8x128xf32>
    %17 = arith.divf %15, %16 : vector<8x128xf32>
    %18 = vector.extract_strided_slice %11 {offsets = [0, 128], sizes = [8, 128], strides = [1, 1]} : vector<8x512xf32> to vector<8x128xf32>
    %19 = arith.negf %18 : vector<8x128xf32>
    %20 = math.exp %19 : vector<8x128xf32>
    %cst_10 = arith.constant 1.000000e+00 : f32
    %21 = vector.broadcast %cst_10 : f32 to vector<8x128xf32>
    %22 = arith.addf %21, %20 : vector<8x128xf32>
    %23 = arith.divf %21, %22 : vector<8x128xf32>
    %24 = vector.extract_strided_slice %11 {offsets = [0, 256], sizes = [8, 128], strides = [1, 1]} : vector<8x512xf32> to vector<8x128xf32>
    %25 = math.tanh %24 : vector<8x128xf32>
    %26 = vector.extract_strided_slice %11 {offsets = [0, 384], sizes = [8, 128], strides = [1, 1]} : vector<8x512xf32> to vector<8x128xf32>
    %27 = arith.negf %26 : vector<8x128xf32>
    %28 = math.exp %27 : vector<8x128xf32>
    %cst_11 = arith.constant 1.000000e+00 : f32
    %29 = vector.broadcast %cst_11 : f32 to vector<8x128xf32>
    %30 = arith.addf %29, %28 : vector<8x128xf32>
    %31 = arith.divf %29, %30 : vector<8x128xf32>
    %32 = arith.mulf %23, %5 : vector<8x128xf32>
    %33 = arith.mulf %17, %25 : vector<8x128xf32>
    %34 = arith.addf %32, %33 : vector<8x128xf32>
    %35 = math.tanh %34 : vector<8x128xf32>
    %36 = arith.mulf %31, %35 : vector<8x128xf32>
    %37 = arith.index_cast %c0_i32_6 : i32 to index
    %c0_12 = arith.constant 0 : index
    %c0_13 = arith.constant 0 : index
    %38 = vector.load %arg6[%37, %c0_12, %c0_13] : memref<8x8x128xf32, #tpu.memory_space<vmem>>, vector<1x8x128xf32>
    %39 = vector.shape_cast %38 : vector<1x8x128xf32> to vector<8x128xf32>
    %40 = vector.shape_cast %36 : vector<8x128xf32> to vector<1x8x128xf32>
    tpu.vector_store %arg6[%37, %c0_12, %c0_13], %40 {strides = array<i32>} : memref<8x8x128xf32, #tpu.memory_space<vmem>>, vector<1x8x128xf32>,
    %41 = arith.index_cast %c0_i32_6 : i32 to index
    %c0_14 = arith.constant 0 : index
    %c0_15 = arith.constant 0 : index
    %42 = vector.load %arg7[%41, %c0_14, %c0_15] : memref<8x8x128xf32, #tpu.memory_space<vmem>>, vector<1x8x128xf32>
    %43 = vector.shape_cast %42 : vector<1x8x128xf32> to vector<8x128xf32>
    %44 = vector.shape_cast %34 : vector<8x128xf32> to vector<1x8x128xf32>
    tpu.vector_store %arg7[%41, %c0_14, %c0_15], %44 {strides = array<i32>} : memref<8x8x128xf32, #tpu.memory_space<vmem>>, vector<1x8x128xf32>,
    %c1_i32 = arith.constant 1 : i32
    %45 = arith.truncf %36 : vector<8x128xf32> to vector<8x128xbf16>
    %cst_16 = arith.constant dense<0.000000e+00> : vector<8x512xf32>
    %46 = tpu.matmul %45, %3, %cst_16 {dimension_numbers = #tpu.dot_dimension_numbers<[1], [0], [0], [1], [0, 0, 1, 1], [], []>} : vector<8x128xbf16>, vector<128x512xbf16>, vector<8x512xf32> -> vector<8x512xf32>
    %47 = arith.index_cast %c1_i32 : i32 to index
    %c0_17 = arith.constant 0 : index
    %c0_18 = arith.constant 0 : index
    %48 = vector.load %arg2[%47, %c0_17, %c0_18] : memref<8x8x512xf32, #tpu.memory_space<vmem>>, vector<1x8x512xf32>
    %49 = vector.shape_cast %48 : vector<1x8x512xf32> to vector<8x512xf32>
    %50 = arith.addf %46, %49 : vector<8x512xf32>
    %51 = vector.extract_strided_slice %50 {offsets = [0, 0], sizes = [8, 128], strides = [1, 1]} : vector<8x512xf32> to vector<8x128xf32>
    %52 = arith.negf %51 : vector<8x128xf32>
    %53 = math.exp %52 : vector<8x128xf32>
    %cst_19 = arith.constant 1.000000e+00 : f32
    %54 = vector.broadcast %cst_19 : f32 to vector<8x128xf32>
    %55 = arith.addf %54, %53 : vector<8x128xf32>
    %56 = arith.divf %54, %55 : vector<8x128xf32>
    %57 = vector.extract_strided_slice %50 {offsets = [0, 128], sizes = [8, 128], strides = [1, 1]} : vector<8x512xf32> to vector<8x128xf32>
    %58 = arith.negf %57 : vector<8x128xf32>
    %59 = math.exp %58 : vector<8x128xf32>
    %cst_20 = arith.constant 1.000000e+00 : f32
    %60 = vector.broadcast %cst_20 : f32 to vector<8x128xf32>
    %61 = arith.addf %60, %59 : vector<8x128xf32>
    %62 = arith.divf %60, %61 : vector<8x128xf32>
    %63 = vector.extract_strided_slice %50 {offsets = [0, 256], sizes = [8, 128], strides = [1, 1]} : vector<8x512xf32> to vector<8x128xf32>
    %64 = math.tanh %63 : vector<8x128xf32>
    %65 = vector.extract_strided_slice %50 {offsets = [0, 384], sizes = [8, 128], strides = [1, 1]} : vector<8x512xf32> to vector<8x128xf32>
    %66 = arith.negf %65 : vector<8x128xf32>
    %67 = math.exp %66 : vector<8x128xf32>
    %cst_21 = arith.constant 1.000000e+00 : f32
    %68 = vector.broadcast %cst_21 : f32 to vector<8x128xf32>
    %69 = arith.addf %68, %67 : vector<8x128xf32>
    %70 = arith.divf %68, %69 : vector<8x128xf32>
    %71 = arith.mulf %62, %34 : vector<8x128xf32>
    %72 = arith.mulf %56, %64 : vector<8x128xf32>
    %73 = arith.addf %71, %72 : vector<8x128xf32>
    %74 = math.tanh %73 : vector<8x128xf32>
    %75 = arith.mulf %70, %74 : vector<8x128xf32>
    %76 = arith.index_cast %c1_i32 : i32 to index
    %c0_22 = arith.constant 0 : index
    %c0_23 = arith.constant 0 : index
    %77 = vector.load %arg6[%76, %c0_22, %c0_23] : memref<8x8x128xf32, #tpu.memory_space<vmem>>, vector<1x8x128xf32>
    %78 = vector.shape_cast %77 : vector<1x8x128xf32> to vector<8x128xf32>
    %79 = vector.shape_cast %75 : vector<8x128xf32> to vector<1x8x128xf32>
    tpu.vector_store %arg6[%76, %c0_22, %c0_23], %79 {strides = array<i32>} : memref<8x8x128xf32, #tpu.memory_space<vmem>>, vector<1x8x128xf32>,
    %80 = arith.index_cast %c1_i32 : i32 to index
    %c0_24 = arith.constant 0 : index
    %c0_25 = arith.constant 0 : index
    %81 = vector.load %arg7[%80, %c0_24, %c0_25] : memref<8x8x128xf32, #tpu.memory_space<vmem>>, vector<1x8x128xf32>
    %82 = vector.shape_cast %81 : vector<1x8x128xf32> to vector<8x128xf32>
    %83 = vector.shape_cast %73 : vector<8x128xf32> to vector<1x8x128xf32>
    tpu.vector_store %arg7[%80, %c0_24, %c0_25], %83 {strides = array<i32>} : memref<8x8x128xf32, #tpu.memory_space<vmem>>, vector<1x8x128xf32>,
    %c2_i32 = arith.constant 2 : i32
    %84 = arith.truncf %75 : vector<8x128xf32> to vector<8x128xbf16>
    %cst_26 = arith.constant dense<0.000000e+00> : vector<8x512xf32>
    %85 = tpu.matmul %84, %3, %cst_26 {dimension_numbers = #tpu.dot_dimension_numbers<[1], [0], [0], [1], [0, 0, 1, 1], [], []>} : vector<8x128xbf16>, vector<128x512xbf16>, vector<8x512xf32> -> vector<8x512xf32>
    %86 = arith.index_cast %c2_i32 : i32 to index
    %c0_27 = arith.constant 0 : index
    %c0_28 = arith.constant 0 : index
    %87 = vector.load %arg2[%86, %c0_27, %c0_28] : memref<8x8x512xf32, #tpu.memory_space<vmem>>, vector<1x8x512xf32>
    %88 = vector.shape_cast %87 : vector<1x8x512xf32> to vector<8x512xf32>
    %89 = arith.addf %85, %88 : vector<8x512xf32>
    %90 = vector.extract_strided_slice %89 {offsets = [0, 0], sizes = [8, 128], strides = [1, 1]} : vector<8x512xf32> to vector<8x128xf32>
    %91 = arith.negf %90 : vector<8x128xf32>
    %92 = math.exp %91 : vector<8x128xf32>
    %cst_29 = arith.constant 1.000000e+00 : f32
    %93 = vector.broadcast %cst_29 : f32 to vector<8x128xf32>
    %94 = arith.addf %93, %92 : vector<8x128xf32>
    %95 = arith.divf %93, %94 : vector<8x128xf32>
    %96 = vector.extract_strided_slice %89 {offsets = [0, 128], sizes = [8, 128], strides = [1, 1]} : vector<8x512xf32> to vector<8x128xf32>
    %97 = arith.negf %96 : vector<8x128xf32>
    %98 = math.exp %97 : vector<8x128xf32>
    %cst_30 = arith.constant 1.000000e+00 : f32
    %99 = vector.broadcast %cst_30 : f32 to vector<8x128xf32>
    %100 = arith.addf %99, %98 : vector<8x128xf32>
    %101 = arith.divf %99, %100 : vector<8x128xf32>
    %102 = vector.extract_strided_slice %89 {offsets = [0, 256], sizes = [8, 128], strides = [1, 1]} : vector<8x512xf32> to vector<8x128xf32>
    %103 = math.tanh %102 : vector<8x128xf32>
    %104 = vector.extract_strided_slice %89 {offsets = [0, 384], sizes = [8, 128], strides = [1, 1]} : vector<8x512xf32> to vector<8x128xf32>
    %105 = arith.negf %104 : vector<8x128xf32>
    %106 = math.exp %105 : vector<8x128xf32>
    %cst_31 = arith.constant 1.000000e+00 : f32
    %107 = vector.broadcast %cst_31 : f32 to vector<8x128xf32>
    %108 = arith.addf %107, %106 : vector<8x128xf32>
    %109 = arith.divf %107, %108 : vector<8x128xf32>
    %110 = arith.mulf %101, %73 : vector<8x128xf32>
    %111 = arith.mulf %95, %103 : vector<8x128xf32>
    %112 = arith.addf %110, %111 : vector<8x128xf32>
    %113 = math.tanh %112 : vector<8x128xf32>
    %114 = arith.mulf %109, %113 : vector<8x128xf32>
    %115 = arith.index_cast %c2_i32 : i32 to index
    %c0_32 = arith.constant 0 : index
    %c0_33 = arith.constant 0 : index
    %116 = vector.load %arg6[%115, %c0_32, %c0_33] : memref<8x8x128xf32, #tpu.memory_space<vmem>>, vector<1x8x128xf32>
    %117 = vector.shape_cast %116 : vector<1x8x128xf32> to vector<8x128xf32>
    %118 = vector.shape_cast %114 : vector<8x128xf32> to vector<1x8x128xf32>
    tpu.vector_store %arg6[%115, %c0_32, %c0_33], %118 {strides = array<i32>} : memref<8x8x128xf32, #tpu.memory_space<vmem>>, vector<1x8x128xf32>,
    %119 = arith.index_cast %c2_i32 : i32 to index
    %c0_34 = arith.constant 0 : index
    %c0_35 = arith.constant 0 : index
    %120 = vector.load %arg7[%119, %c0_34, %c0_35] : memref<8x8x128xf32, #tpu.memory_space<vmem>>, vector<1x8x128xf32>
    %121 = vector.shape_cast %120 : vector<1x8x128xf32> to vector<8x128xf32>
    %122 = vector.shape_cast %112 : vector<8x128xf32> to vector<1x8x128xf32>
    tpu.vector_store %arg7[%119, %c0_34, %c0_35], %122 {strides = array<i32>} : memref<8x8x128xf32, #tpu.memory_space<vmem>>, vector<1x8x128xf32>,
    %c3_i32 = arith.constant 3 : i32
    %123 = arith.truncf %114 : vector<8x128xf32> to vector<8x128xbf16>
    %cst_36 = arith.constant dense<0.000000e+00> : vector<8x512xf32>
    %124 = tpu.matmul %123, %3, %cst_36 {dimension_numbers = #tpu.dot_dimension_numbers<[1], [0], [0], [1], [0, 0, 1, 1], [], []>} : vector<8x128xbf16>, vector<128x512xbf16>, vector<8x512xf32> -> vector<8x512xf32>
    %125 = arith.index_cast %c3_i32 : i32 to index
    %c0_37 = arith.constant 0 : index
    %c0_38 = arith.constant 0 : index
    %126 = vector.load %arg2[%125, %c0_37, %c0_38] : memref<8x8x512xf32, #tpu.memory_space<vmem>>, vector<1x8x512xf32>
    %127 = vector.shape_cast %126 : vector<1x8x512xf32> to vector<8x512xf32>
    %128 = arith.addf %124, %127 : vector<8x512xf32>
    %129 = vector.extract_strided_slice %128 {offsets = [0, 0], sizes = [8, 128], strides = [1, 1]} : vector<8x512xf32> to vector<8x128xf32>
    %130 = arith.negf %129 : vector<8x128xf32>
    %131 = math.exp %130 : vector<8x128xf32>
    %cst_39 = arith.constant 1.000000e+00 : f32
    %132 = vector.broadcast %cst_39 : f32 to vector<8x128xf32>
    %133 = arith.addf %132, %131 : vector<8x128xf32>
    %134 = arith.divf %132, %133 : vector<8x128xf32>
    %135 = vector.extract_strided_slice %128 {offsets = [0, 128], sizes = [8, 128], strides = [1, 1]} : vector<8x512xf32> to vector<8x128xf32>
    %136 = arith.negf %135 : vector<8x128xf32>
    %137 = math.exp %136 : vector<8x128xf32>
    %cst_40 = arith.constant 1.000000e+00 : f32
    %138 = vector.broadcast %cst_40 : f32 to vector<8x128xf32>
    %139 = arith.addf %138, %137 : vector<8x128xf32>
    %140 = arith.divf %138, %139 : vector<8x128xf32>
    %141 = vector.extract_strided_slice %128 {offsets = [0, 256], sizes = [8, 128], strides = [1, 1]} : vector<8x512xf32> to vector<8x128xf32>
    %142 = math.tanh %141 : vector<8x128xf32>
    %143 = vector.extract_strided_slice %128 {offsets = [0, 384], sizes = [8, 128], strides = [1, 1]} : vector<8x512xf32> to vector<8x128xf32>
    %144 = arith.negf %143 : vector<8x128xf32>
    %145 = math.exp %144 : vector<8x128xf32>
    %cst_41 = arith.constant 1.000000e+00 : f32
    %146 = vector.broadcast %cst_41 : f32 to vector<8x128xf32>
    %147 = arith.addf %146, %145 : vector<8x128xf32>
    %148 = arith.divf %146, %147 : vector<8x128xf32>
    %149 = arith.mulf %140, %112 : vector<8x128xf32>
    %150 = arith.mulf %134, %142 : vector<8x128xf32>
    %151 = arith.addf %149, %150 : vector<8x128xf32>
    %152 = math.tanh %151 : vector<8x128xf32>
    %153 = arith.mulf %148, %152 : vector<8x128xf32>
    %154 = arith.index_cast %c3_i32 : i32 to index
    %c0_42 = arith.constant 0 : index
    %c0_43 = arith.constant 0 : index
    %155 = vector.load %arg6[%154, %c0_42, %c0_43] : memref<8x8x128xf32, #tpu.memory_space<vmem>>, vector<1x8x128xf32>
    %156 = vector.shape_cast %155 : vector<1x8x128xf32> to vector<8x128xf32>
    %157 = vector.shape_cast %153 : vector<8x128xf32> to vector<1x8x128xf32>
    tpu.vector_store %arg6[%154, %c0_42, %c0_43], %157 {strides = array<i32>} : memref<8x8x128xf32, #tpu.memory_space<vmem>>, vector<1x8x128xf32>,
    %158 = arith.index_cast %c3_i32 : i32 to index
    %c0_44 = arith.constant 0 : index
    %c0_45 = arith.constant 0 : index
    %159 = vector.load %arg7[%158, %c0_44, %c0_45] : memref<8x8x128xf32, #tpu.memory_space<vmem>>, vector<1x8x128xf32>
    %160 = vector.shape_cast %159 : vector<1x8x128xf32> to vector<8x128xf32>
    %161 = vector.shape_cast %151 : vector<8x128xf32> to vector<1x8x128xf32>
    tpu.vector_store %arg7[%158, %c0_44, %c0_45], %161 {strides = array<i32>} : memref<8x8x128xf32, #tpu.memory_space<vmem>>, vector<1x8x128xf32>,
    %c4_i32 = arith.constant 4 : i32
    %162 = arith.truncf %153 : vector<8x128xf32> to vector<8x128xbf16>
    %cst_46 = arith.constant dense<0.000000e+00> : vector<8x512xf32>
    %163 = tpu.matmul %162, %3, %cst_46 {dimension_numbers = #tpu.dot_dimension_numbers<[1], [0], [0], [1], [0, 0, 1, 1], [], []>} : vector<8x128xbf16>, vector<128x512xbf16>, vector<8x512xf32> -> vector<8x512xf32>
    %164 = arith.index_cast %c4_i32 : i32 to index
    %c0_47 = arith.constant 0 : index
    %c0_48 = arith.constant 0 : index
    %165 = vector.load %arg2[%164, %c0_47, %c0_48] : memref<8x8x512xf32, #tpu.memory_space<vmem>>, vector<1x8x512xf32>
    %166 = vector.shape_cast %165 : vector<1x8x512xf32> to vector<8x512xf32>
    %167 = arith.addf %163, %166 : vector<8x512xf32>
    %168 = vector.extract_strided_slice %167 {offsets = [0, 0], sizes = [8, 128], strides = [1, 1]} : vector<8x512xf32> to vector<8x128xf32>
    %169 = arith.negf %168 : vector<8x128xf32>
    %170 = math.exp %169 : vector<8x128xf32>
    %cst_49 = arith.constant 1.000000e+00 : f32
    %171 = vector.broadcast %cst_49 : f32 to vector<8x128xf32>
    %172 = arith.addf %171, %170 : vector<8x128xf32>
    %173 = arith.divf %171, %172 : vector<8x128xf32>
    %174 = vector.extract_strided_slice %167 {offsets = [0, 128], sizes = [8, 128], strides = [1, 1]} : vector<8x512xf32> to vector<8x128xf32>
    %175 = arith.negf %174 : vector<8x128xf32>
    %176 = math.exp %175 : vector<8x128xf32>
    %cst_50 = arith.constant 1.000000e+00 : f32
    %177 = vector.broadcast %cst_50 : f32 to vector<8x128xf32>
    %178 = arith.addf %177, %176 : vector<8x128xf32>
    %179 = arith.divf %177, %178 : vector<8x128xf32>
    %180 = vector.extract_strided_slice %167 {offsets = [0, 256], sizes = [8, 128], strides = [1, 1]} : vector<8x512xf32> to vector<8x128xf32>
    %181 = math.tanh %180 : vector<8x128xf32>
    %182 = vector.extract_strided_slice %167 {offsets = [0, 384], sizes = [8, 128], strides = [1, 1]} : vector<8x512xf32> to vector<8x128xf32>
    %183 = arith.negf %182 : vector<8x128xf32>
    %184 = math.exp %183 : vector<8x128xf32>
    %cst_51 = arith.constant 1.000000e+00 : f32
    %185 = vector.broadcast %cst_51 : f32 to vector<8x128xf32>
    %186 = arith.addf %185, %184 : vector<8x128xf32>
    %187 = arith.divf %185, %186 : vector<8x128xf32>
    %188 = arith.mulf %179, %151 : vector<8x128xf32>
    %189 = arith.mulf %173, %181 : vector<8x128xf32>
    %190 = arith.addf %188, %189 : vector<8x128xf32>
    %191 = math.tanh %190 : vector<8x128xf32>
    %192 = arith.mulf %187, %191 : vector<8x128xf32>
    %193 = arith.index_cast %c4_i32 : i32 to index
    %c0_52 = arith.constant 0 : index
    %c0_53 = arith.constant 0 : index
    %194 = vector.load %arg6[%193, %c0_52, %c0_53] : memref<8x8x128xf32, #tpu.memory_space<vmem>>, vector<1x8x128xf32>
    %195 = vector.shape_cast %194 : vector<1x8x128xf32> to vector<8x128xf32>
    %196 = vector.shape_cast %192 : vector<8x128xf32> to vector<1x8x128xf32>
    tpu.vector_store %arg6[%193, %c0_52, %c0_53], %196 {strides = array<i32>} : memref<8x8x128xf32, #tpu.memory_space<vmem>>, vector<1x8x128xf32>,
    %197 = arith.index_cast %c4_i32 : i32 to index
    %c0_54 = arith.constant 0 : index
    %c0_55 = arith.constant 0 : index
    %198 = vector.load %arg7[%197, %c0_54, %c0_55] : memref<8x8x128xf32, #tpu.memory_space<vmem>>, vector<1x8x128xf32>
    %199 = vector.shape_cast %198 : vector<1x8x128xf32> to vector<8x128xf32>
    %200 = vector.shape_cast %190 : vector<8x128xf32> to vector<1x8x128xf32>
    tpu.vector_store %arg7[%197, %c0_54, %c0_55], %200 {strides = array<i32>} : memref<8x8x128xf32, #tpu.memory_space<vmem>>, vector<1x8x128xf32>,
    %c5_i32 = arith.constant 5 : i32
    %201 = arith.truncf %192 : vector<8x128xf32> to vector<8x128xbf16>
    %cst_56 = arith.constant dense<0.000000e+00> : vector<8x512xf32>
    %202 = tpu.matmul %201, %3, %cst_56 {dimension_numbers = #tpu.dot_dimension_numbers<[1], [0], [0], [1], [0, 0, 1, 1], [], []>} : vector<8x128xbf16>, vector<128x512xbf16>, vector<8x512xf32> -> vector<8x512xf32>
    %203 = arith.index_cast %c5_i32 : i32 to index
    %c0_57 = arith.constant 0 : index
    %c0_58 = arith.constant 0 : index
    %204 = vector.load %arg2[%203, %c0_57, %c0_58] : memref<8x8x512xf32, #tpu.memory_space<vmem>>, vector<1x8x512xf32>
    %205 = vector.shape_cast %204 : vector<1x8x512xf32> to vector<8x512xf32>
    %206 = arith.addf %202, %205 : vector<8x512xf32>
    %207 = vector.extract_strided_slice %206 {offsets = [0, 0], sizes = [8, 128], strides = [1, 1]} : vector<8x512xf32> to vector<8x128xf32>
    %208 = arith.negf %207 : vector<8x128xf32>
    %209 = math.exp %208 : vector<8x128xf32>
    %cst_59 = arith.constant 1.000000e+00 : f32
    %210 = vector.broadcast %cst_59 : f32 to vector<8x128xf32>
    %211 = arith.addf %210, %209 : vector<8x128xf32>
    %212 = arith.divf %210, %211 : vector<8x128xf32>
    %213 = vector.extract_strided_slice %206 {offsets = [0, 128], sizes = [8, 128], strides = [1, 1]} : vector<8x512xf32> to vector<8x128xf32>
    %214 = arith.negf %213 : vector<8x128xf32>
    %215 = math.exp %214 : vector<8x128xf32>
    %cst_60 = arith.constant 1.000000e+00 : f32
    %216 = vector.broadcast %cst_60 : f32 to vector<8x128xf32>
    %217 = arith.addf %216, %215 : vector<8x128xf32>
    %218 = arith.divf %216, %217 : vector<8x128xf32>
    %219 = vector.extract_strided_slice %206 {offsets = [0, 256], sizes = [8, 128], strides = [1, 1]} : vector<8x512xf32> to vector<8x128xf32>
    %220 = math.tanh %219 : vector<8x128xf32>
    %221 = vector.extract_strided_slice %206 {offsets = [0, 384], sizes = [8, 128], strides = [1, 1]} : vector<8x512xf32> to vector<8x128xf32>
    %222 = arith.negf %221 : vector<8x128xf32>
    %223 = math.exp %222 : vector<8x128xf32>
    %cst_61 = arith.constant 1.000000e+00 : f32
    %224 = vector.broadcast %cst_61 : f32 to vector<8x128xf32>
    %225 = arith.addf %224, %223 : vector<8x128xf32>
    %226 = arith.divf %224, %225 : vector<8x128xf32>
    %227 = arith.mulf %218, %190 : vector<8x128xf32>
    %228 = arith.mulf %212, %220 : vector<8x128xf32>
    %229 = arith.addf %227, %228 : vector<8x128xf32>
    %230 = math.tanh %229 : vector<8x128xf32>
    %231 = arith.mulf %226, %230 : vector<8x128xf32>
    %232 = arith.index_cast %c5_i32 : i32 to index
    %c0_62 = arith.constant 0 : index
    %c0_63 = arith.constant 0 : index
    %233 = vector.load %arg6[%232, %c0_62, %c0_63] : memref<8x8x128xf32, #tpu.memory_space<vmem>>, vector<1x8x128xf32>
    %234 = vector.shape_cast %233 : vector<1x8x128xf32> to vector<8x128xf32>
    %235 = vector.shape_cast %231 : vector<8x128xf32> to vector<1x8x128xf32>
    tpu.vector_store %arg6[%232, %c0_62, %c0_63], %235 {strides = array<i32>} : memref<8x8x128xf32, #tpu.memory_space<vmem>>, vector<1x8x128xf32>,
    %236 = arith.index_cast %c5_i32 : i32 to index
    %c0_64 = arith.constant 0 : index
    %c0_65 = arith.constant 0 : index
    %237 = vector.load %arg7[%236, %c0_64, %c0_65] : memref<8x8x128xf32, #tpu.memory_space<vmem>>, vector<1x8x128xf32>
    %238 = vector.shape_cast %237 : vector<1x8x128xf32> to vector<8x128xf32>
    %239 = vector.shape_cast %229 : vector<8x128xf32> to vector<1x8x128xf32>
    tpu.vector_store %arg7[%236, %c0_64, %c0_65], %239 {strides = array<i32>} : memref<8x8x128xf32, #tpu.memory_space<vmem>>, vector<1x8x128xf32>,
    %c6_i32 = arith.constant 6 : i32
    %240 = arith.truncf %231 : vector<8x128xf32> to vector<8x128xbf16>
    %cst_66 = arith.constant dense<0.000000e+00> : vector<8x512xf32>
    %241 = tpu.matmul %240, %3, %cst_66 {dimension_numbers = #tpu.dot_dimension_numbers<[1], [0], [0], [1], [0, 0, 1, 1], [], []>} : vector<8x128xbf16>, vector<128x512xbf16>, vector<8x512xf32> -> vector<8x512xf32>
    %242 = arith.index_cast %c6_i32 : i32 to index
    %c0_67 = arith.constant 0 : index
    %c0_68 = arith.constant 0 : index
    %243 = vector.load %arg2[%242, %c0_67, %c0_68] : memref<8x8x512xf32, #tpu.memory_space<vmem>>, vector<1x8x512xf32>
    %244 = vector.shape_cast %243 : vector<1x8x512xf32> to vector<8x512xf32>
    %245 = arith.addf %241, %244 : vector<8x512xf32>
    %246 = vector.extract_strided_slice %245 {offsets = [0, 0], sizes = [8, 128], strides = [1, 1]} : vector<8x512xf32> to vector<8x128xf32>
    %247 = arith.negf %246 : vector<8x128xf32>
    %248 = math.exp %247 : vector<8x128xf32>
    %cst_69 = arith.constant 1.000000e+00 : f32
    %249 = vector.broadcast %cst_69 : f32 to vector<8x128xf32>
    %250 = arith.addf %249, %248 : vector<8x128xf32>
    %251 = arith.divf %249, %250 : vector<8x128xf32>
    %252 = vector.extract_strided_slice %245 {offsets = [0, 128], sizes = [8, 128], strides = [1, 1]} : vector<8x512xf32> to vector<8x128xf32>
    %253 = arith.negf %252 : vector<8x128xf32>
    %254 = math.exp %253 : vector<8x128xf32>
    %cst_70 = arith.constant 1.000000e+00 : f32
    %255 = vector.broadcast %cst_70 : f32 to vector<8x128xf32>
    %256 = arith.addf %255, %254 : vector<8x128xf32>
    %257 = arith.divf %255, %256 : vector<8x128xf32>
    %258 = vector.extract_strided_slice %245 {offsets = [0, 256], sizes = [8, 128], strides = [1, 1]} : vector<8x512xf32> to vector<8x128xf32>
    %259 = math.tanh %258 : vector<8x128xf32>
    %260 = vector.extract_strided_slice %245 {offsets = [0, 384], sizes = [8, 128], strides = [1, 1]} : vector<8x512xf32> to vector<8x128xf32>
    %261 = arith.negf %260 : vector<8x128xf32>
    %262 = math.exp %261 : vector<8x128xf32>
    %cst_71 = arith.constant 1.000000e+00 : f32
    %263 = vector.broadcast %cst_71 : f32 to vector<8x128xf32>
    %264 = arith.addf %263, %262 : vector<8x128xf32>
    %265 = arith.divf %263, %264 : vector<8x128xf32>
    %266 = arith.mulf %257, %229 : vector<8x128xf32>
    %267 = arith.mulf %251, %259 : vector<8x128xf32>
    %268 = arith.addf %266, %267 : vector<8x128xf32>
    %269 = math.tanh %268 : vector<8x128xf32>
    %270 = arith.mulf %265, %269 : vector<8x128xf32>
    %271 = arith.index_cast %c6_i32 : i32 to index
    %c0_72 = arith.constant 0 : index
    %c0_73 = arith.constant 0 : index
    %272 = vector.load %arg6[%271, %c0_72, %c0_73] : memref<8x8x128xf32, #tpu.memory_space<vmem>>, vector<1x8x128xf32>
    %273 = vector.shape_cast %272 : vector<1x8x128xf32> to vector<8x128xf32>
    %274 = vector.shape_cast %270 : vector<8x128xf32> to vector<1x8x128xf32>
    tpu.vector_store %arg6[%271, %c0_72, %c0_73], %274 {strides = array<i32>} : memref<8x8x128xf32, #tpu.memory_space<vmem>>, vector<1x8x128xf32>,
    %275 = arith.index_cast %c6_i32 : i32 to index
    %c0_74 = arith.constant 0 : index
    %c0_75 = arith.constant 0 : index
    %276 = vector.load %arg7[%275, %c0_74, %c0_75] : memref<8x8x128xf32, #tpu.memory_space<vmem>>, vector<1x8x128xf32>
    %277 = vector.shape_cast %276 : vector<1x8x128xf32> to vector<8x128xf32>
    %278 = vector.shape_cast %268 : vector<8x128xf32> to vector<1x8x128xf32>
    tpu.vector_store %arg7[%275, %c0_74, %c0_75], %278 {strides = array<i32>} : memref<8x8x128xf32, #tpu.memory_space<vmem>>, vector<1x8x128xf32>,
    %c7_i32 = arith.constant 7 : i32
    %279 = arith.truncf %270 : vector<8x128xf32> to vector<8x128xbf16>
    %cst_76 = arith.constant dense<0.000000e+00> : vector<8x512xf32>
    %280 = tpu.matmul %279, %3, %cst_76 {dimension_numbers = #tpu.dot_dimension_numbers<[1], [0], [0], [1], [0, 0, 1, 1], [], []>} : vector<8x128xbf16>, vector<128x512xbf16>, vector<8x512xf32> -> vector<8x512xf32>
    %281 = arith.index_cast %c7_i32 : i32 to index
    %c0_77 = arith.constant 0 : index
    %c0_78 = arith.constant 0 : index
    %282 = vector.load %arg2[%281, %c0_77, %c0_78] : memref<8x8x512xf32, #tpu.memory_space<vmem>>, vector<1x8x512xf32>
    %283 = vector.shape_cast %282 : vector<1x8x512xf32> to vector<8x512xf32>
    %284 = arith.addf %280, %283 : vector<8x512xf32>
    %285 = vector.extract_strided_slice %284 {offsets = [0, 0], sizes = [8, 128], strides = [1, 1]} : vector<8x512xf32> to vector<8x128xf32>
    %286 = arith.negf %285 : vector<8x128xf32>
    %287 = math.exp %286 : vector<8x128xf32>
    %cst_79 = arith.constant 1.000000e+00 : f32
    %288 = vector.broadcast %cst_79 : f32 to vector<8x128xf32>
    %289 = arith.addf %288, %287 : vector<8x128xf32>
    %290 = arith.divf %288, %289 : vector<8x128xf32>
    %291 = vector.extract_strided_slice %284 {offsets = [0, 128], sizes = [8, 128], strides = [1, 1]} : vector<8x512xf32> to vector<8x128xf32>
    %292 = arith.negf %291 : vector<8x128xf32>
    %293 = math.exp %292 : vector<8x128xf32>
    %cst_80 = arith.constant 1.000000e+00 : f32
    %294 = vector.broadcast %cst_80 : f32 to vector<8x128xf32>
    %295 = arith.addf %294, %293 : vector<8x128xf32>
    %296 = arith.divf %294, %295 : vector<8x128xf32>
    %297 = vector.extract_strided_slice %284 {offsets = [0, 256], sizes = [8, 128], strides = [1, 1]} : vector<8x512xf32> to vector<8x128xf32>
    %298 = math.tanh %297 : vector<8x128xf32>
    %299 = vector.extract_strided_slice %284 {offsets = [0, 384], sizes = [8, 128], strides = [1, 1]} : vector<8x512xf32> to vector<8x128xf32>
    %300 = arith.negf %299 : vector<8x128xf32>
    %301 = math.exp %300 : vector<8x128xf32>
    %cst_81 = arith.constant 1.000000e+00 : f32
    %302 = vector.broadcast %cst_81 : f32 to vector<8x128xf32>
    %303 = arith.addf %302, %301 : vector<8x128xf32>
    %304 = arith.divf %302, %303 : vector<8x128xf32>
    %305 = arith.mulf %296, %268 : vector<8x128xf32>
    %306 = arith.mulf %290, %298 : vector<8x128xf32>
    %307 = arith.addf %305, %306 : vector<8x128xf32>
    %308 = math.tanh %307 : vector<8x128xf32>
    %309 = arith.mulf %304, %308 : vector<8x128xf32>
    %310 = arith.index_cast %c7_i32 : i32 to index
    %c0_82 = arith.constant 0 : index
    %c0_83 = arith.constant 0 : index
    %311 = vector.load %arg6[%310, %c0_82, %c0_83] : memref<8x8x128xf32, #tpu.memory_space<vmem>>, vector<1x8x128xf32>
    %312 = vector.shape_cast %311 : vector<1x8x128xf32> to vector<8x128xf32>
    %313 = vector.shape_cast %309 : vector<8x128xf32> to vector<1x8x128xf32>
    tpu.vector_store %arg6[%310, %c0_82, %c0_83], %313 {strides = array<i32>} : memref<8x8x128xf32, #tpu.memory_space<vmem>>, vector<1x8x128xf32>,
    %314 = arith.index_cast %c7_i32 : i32 to index
    %c0_84 = arith.constant 0 : index
    %c0_85 = arith.constant 0 : index
    %315 = vector.load %arg7[%314, %c0_84, %c0_85] : memref<8x8x128xf32, #tpu.memory_space<vmem>>, vector<1x8x128xf32>
    %316 = vector.shape_cast %315 : vector<1x8x128xf32> to vector<8x128xf32>
    %317 = vector.shape_cast %307 : vector<8x128xf32> to vector<1x8x128xf32>
    tpu.vector_store %arg7[%314, %c0_84, %c0_85], %317 {strides = array<i32>} : memref<8x8x128xf32, #tpu.memory_space<vmem>>, vector<1x8x128xf32>,
    %c8_i32 = arith.constant 8 : i32
    %c0_86 = arith.constant 0 : index
    %c0_87 = arith.constant 0 : index
    %318 = vector.load %arg8[%c0_86, %c0_87] : memref<8x128xf32, #tpu.memory_space<vmem>>, vector<8x128xf32>
    tpu.vector_store %arg8[%c0_86, %c0_87], %309 {strides = array<i32>} : memref<8x128xf32, #tpu.memory_space<vmem>>, vector<8x128xf32>,
    %c0_88 = arith.constant 0 : index
    %c0_89 = arith.constant 0 : index
    %319 = vector.load %arg9[%c0_88, %c0_89] : memref<8x128xf32, #tpu.memory_space<vmem>>, vector<8x128xf32>
    tpu.vector_store %arg9[%c0_88, %c0_89], %307 {strides = array<i32>} : memref<8x128xf32, #tpu.memory_space<vmem>>, vector<8x128xf32>,
    return
  }
  func.func @transform_0(%arg0: i32, %arg1: i32) -> (i32, i32, i32) {
    %c0_i32 = arith.constant 0 : i32
    %c0_i32_0 = arith.constant 0 : i32
    return %arg1, %arg0, %c0_i32 : i32, i32, i32
  }
  func.func @transform_1(%arg0: i32, %arg1: i32) -> (i32, i32) {
    %c0_i32 = arith.constant 0 : i32
    %c0_i32_0 = arith.constant 0 : i32
    return %arg0, %c0_i32 : i32, i32
  }
  func.func @transform_2(%arg0: i32, %arg1: i32) -> (i32, i32) {
    %c0_i32 = arith.constant 0 : i32
    %c0_i32_0 = arith.constant 0 : i32
    return %arg0, %c0_i32 : i32, i32
  }
  func.func @transform_3(%arg0: i32, %arg1: i32) -> (i32, i32) {
    %c0_i32 = arith.constant 0 : i32
    %c0_i32_0 = arith.constant 0 : i32
    %c0_i32_1 = arith.constant 0 : i32
    return %c0_i32, %c0_i32_0 : i32, i32
  }
  func.func @transform_4(%arg0: i32, %arg1: i32) -> (i32, i32, i32) {
    %c0_i32 = arith.constant 0 : i32
    %c0_i32_0 = arith.constant 0 : i32
    return %arg1, %arg0, %c0_i32 : i32, i32, i32
  }
  func.func @transform_5(%arg0: i32, %arg1: i32) -> (i32, i32, i32) {
    %c0_i32 = arith.constant 0 : i32
    %c0_i32_0 = arith.constant 0 : i32
    return %arg1, %arg0, %c0_i32 : i32, i32, i32
  }
}

</mosaic_0001>

<llo_original>
// kernel: language_encoding_lstm_sequence.1
$region0: #{language_encoding_lstm_sequence.1}
  #allocation0 [shape = 'u32[]', space=smem, size = 0x4, offset = 0x4, fixed_abs, tag = 'smem constant byte address 0x4 - core index']
  #allocation1 [shape = 'u32[144,128]{1,0:T(1,128)}', space=vmem, size = 0x12000, scoped, tag = 'internal scratch']
  #allocation2 [shape = 'f32[8,128]{1,0:T(8,128)}', space=vmem, size = 0x1000, scoped, tag = 'scratch operand']
  #allocation3 [shape = 'f32[8,128]{1,0:T(8,128)}', space=vmem, size = 0x1000, scoped, tag = 'scratch operand']
  %s0 = inlined_call_operand.hbm [shape: f32[8,8,512], index: 0, kind: input, shape index: {}]
  %s1 = inlined_call_operand.hbm [shape: f32[8,128], index: 1, kind: input, shape index: {}]
  %s2 = inlined_call_operand.hbm [shape: f32[8,128], index: 2, kind: input, shape index: {}]
  %s3 = inlined_call_operand.hbm [shape: bf16[128,512], index: 3, kind: input, shape index: {}]
  %s4 = inlined_call_operand.hbm [shape: f32[8,8,128], index: 4, kind: output, shape index: {0}]
  %s5 = inlined_call_operand.hbm [shape: f32[8,8,128], index: 5, kind: output, shape index: {1}]
  %6 = xla_tuple %s4, %s5
  %s7 = sld [smem:[#allocation0]]
  $region54: #{language_encoding_lstm_sequence.1} parent=0
    _
  %s9 = ssub.s32 1, %s7
  %s10 = scalar_select 0, %s9, %s7
  $region1: #{language_encoding_lstm_sequence.1} parent=0
    #allocation4 [shape = 'u8[131072]{0}', space=vmem, size = 0x20000, scoped, tag = 'input window, operand 0, single buffered']
    #allocation5 [shape = 's32[1]{0}', space=sflag, size = 0x4, scoped, tag = 'scoped memory for language_encoding_lstm_sequence.1']
    #allocation6 [shape = 's32[1]{0}', space=sflag, size = 0x4, scoped, tag = 'scoped memory for language_encoding_lstm_sequence.1']
    #allocation7 [shape = 'u8[4096]{0}', space=vmem, size = 0x1000, scoped, tag = 'input window, operand 1, single buffered']
    #allocation8 [shape = 's32[1]{0}', space=sflag, size = 0x4, scoped, tag = 'scoped memory for language_encoding_lstm_sequence.1']
    #allocation9 [shape = 'u8[4096]{0}', space=vmem, size = 0x1000, scoped, tag = 'input window, operand 2, single buffered']
    #allocation10 [shape = 'u8[131072]{0}', space=vmem, size = 0x20000, scoped, tag = 'input window, operand 3, single buffered']
    #allocation11 [shape = 's32[1]{0}', space=sflag, size = 0x4, scoped, tag = 'scoped memory for language_encoding_lstm_sequence.1']
    #allocation12 [shape = 'u8[32768]{0}', space=vmem, size = 0x8000, scoped, tag = 'output window, operand 0, single buffered']
    #allocation13 [shape = 'u8[32768]{0}', space=vmem, size = 0x8000, scoped, tag = 'output window, operand 1, single buffered']
    #allocation14 [shape = 's32[1]{0}', space=sflag, size = 0x4, scoped, tag = 'scoped memory for language_encoding_lstm_sequence.1']
    %11 = vsyncpa [#allocation5], 0
    %12 = vsyncpa [#allocation8], 0
    %13 = vsyncpa [#allocation11], 0
    %14 = vsyncpa [#allocation6], 0
    %15 = vsyncpa [#allocation14], 0
    // Predicated region
    $region2: #{language_encoding_lstm_sequence.1} parent=1 // pred_check
      _
    $region3: #{language_encoding_lstm_sequence.1} parent=1 // pred_check_branch
      %17 = sbr.rel (0) target = $region5
    $region4: #{language_encoding_lstm_sequence.1} parent=1 // pred_region
      %s19 = ssub.s32 4096, 4096
      %20 = vsyncadd [#allocation5], %s19
      %s21 = sshll.u32 [#allocation4], 4
      %s22 = int_to_ptr.vmem [resolvable:$true] %s21
      %27 = dma.hbm_to_vmem [thread:$0]  %s0, 4096, %s22, [#allocation5], 512, 512, 32
    $region5: #{language_encoding_lstm_sequence.1} parent=1 // pred_fallthru
      _
    // Predicated region
    $region6: #{language_encoding_lstm_sequence.1} parent=1 // pred_check
      _
    $region7: #{language_encoding_lstm_sequence.1} parent=1 // pred_check_branch
      %29 = sbr.rel (0) target = $region9
    $region8: #{language_encoding_lstm_sequence.1} parent=1 // pred_region
      %s31 = ssub.s32 128, 128
      %32 = vsyncadd [#allocation8], %s31
      %s34 = sshll.u32 [#allocation7], 4
      %s35 = int_to_ptr.vmem [resolvable:$true] %s34
      %37 = dma.hbm_to_vmem [thread:$0]  %s1, 128, %s35, [#allocation8]
    $region9: #{language_encoding_lstm_sequence.1} parent=1 // pred_fallthru
      _
    // Predicated region
    $region10: #{language_encoding_lstm_sequence.1} parent=1 // pred_check
      _
    $region11: #{language_encoding_lstm_sequence.1} parent=1 // pred_check_branch
      %39 = sbr.rel (0) target = $region13
    $region12: #{language_encoding_lstm_sequence.1} parent=1 // pred_region
      %s41 = ssub.s32 128, 128
      %42 = vsyncadd [#allocation8], %s41
      %s44 = sshll.u32 [#allocation9], 4
      %s45 = int_to_ptr.vmem [resolvable:$true] %s44
      %47 = dma.hbm_to_vmem [thread:$0]  %s2, 128, %s45, [#allocation8]
    $region13: #{language_encoding_lstm_sequence.1} parent=1 // pred_fallthru
      _
    // Predicated region
    $region14: #{language_encoding_lstm_sequence.1} parent=1 // pred_check
      _
    $region15: #{language_encoding_lstm_sequence.1} parent=1 // pred_check_branch
      %49 = sbr.rel (0) target = $region17
    $region16: #{language_encoding_lstm_sequence.1} parent=1 // pred_region
      %s51 = ssub.s32 4096, 4096
      %52 = vsyncadd [#allocation11], %s51
      %s53 = sshll.u32 [#allocation10], 4
      %s54 = int_to_ptr.vmem [resolvable:$true] %s53
      %59 = dma.hbm_to_vmem [thread:$0]  %s3, 4096, %s54, [#allocation11], 256, 256, 16
    $region17: #{language_encoding_lstm_sequence.1} parent=1 // pred_fallthru
      _
    // Predicated region
    $region18: #{language_encoding_lstm_sequence.1} parent=1 // pred_check
      _
    $region19: #{language_encoding_lstm_sequence.1} parent=1 // pred_check_branch
      %61 = sbr.rel (0) target = $region21
    $region20: #{language_encoding_lstm_sequence.1} parent=1 // pred_region
      %62 = dma.done [#allocation5], 4096
    $region21: #{language_encoding_lstm_sequence.1} parent=1 // pred_fallthru
      _
    // Predicated region
    $region22: #{language_encoding_lstm_sequence.1} parent=1 // pred_check
      _
    $region23: #{language_encoding_lstm_sequence.1} parent=1 // pred_check_branch
      %64 = sbr.rel (0) target = $region25
    $region24: #{language_encoding_lstm_sequence.1} parent=1 // pred_region
      %65 = dma.done [#allocation8], 128
    $region25: #{language_encoding_lstm_sequence.1} parent=1 // pred_fallthru
      _
    // Predicated region
    $region26: #{language_encoding_lstm_sequence.1} parent=1 // pred_check
      _
    $region27: #{language_encoding_lstm_sequence.1} parent=1 // pred_check_branch
      %67 = sbr.rel (0) target = $region29
    $region28: #{language_encoding_lstm_sequence.1} parent=1 // pred_region
      %68 = dma.done [#allocation8], 128
    $region29: #{language_encoding_lstm_sequence.1} parent=1 // pred_fallthru
      _
    // Predicated region
    $region30: #{language_encoding_lstm_sequence.1} parent=1 // pred_check
      _
    $region31: #{language_encoding_lstm_sequence.1} parent=1 // pred_check_branch
      %70 = sbr.rel (0) target = $region33
    $region32: #{language_encoding_lstm_sequence.1} parent=1 // pred_region
      %71 = dma.done [#allocation11], 4096
    $region33: #{language_encoding_lstm_sequence.1} parent=1 // pred_fallthru
      _
    %p73 = scmp.eq.s32.totalorder 0, 0
    // Predicated region
    $region34: #{language_encoding_lstm_sequence.1} parent=1 // pred_check
      %p74 = pneg %p73
    $region35: #{language_encoding_lstm_sequence.1} parent=1 // pred_check_branch
      %76 = sbr.rel (%p74) target = $region37
    $region36: #{language_encoding_lstm_sequence.1} parent=1 // pred_region
      %v77 = vld [vmem:[#allocation7] sm:$0xff]
      %78 = vst [vmem:[#allocation2] sm:$0xff] %v77
      %v79 = vld [vmem:[#allocation9] sm:$0xff]
      %80 = vst [vmem:[#allocation3] sm:$0xff] %v79
    $region37: #{language_encoding_lstm_sequence.1} parent=1 // pred_fallthru
      _
    %v81 = vld [vmem:[#allocation10] sm:$0xff]
    %v82 = vld [vmem:[#allocation10 + $0x8] sm:$0xff]
    %v83 = vld [vmem:[#allocation10 + $0x10] sm:$0xff]
    %v84 = vld [vmem:[#allocation10 + $0x18] sm:$0xff]
    %v85 = vld [vmem:[#allocation10 + $0x20] sm:$0xff]
    %v86 = vld [vmem:[#allocation10 + $0x28] sm:$0xff]
    %v87 = vld [vmem:[#allocation10 + $0x30] sm:$0xff]
    %v88 = vld [vmem:[#allocation10 + $0x38] sm:$0xff]
    %v89 = vld [vmem:[#allocation10 + $0x40] sm:$0xff]
    %v90 = vld [vmem:[#allocation10 + $0x48] sm:$0xff]
    %v91 = vld [vmem:[#allocation10 + $0x50] sm:$0xff]
    %v92 = vld [vmem:[#allocation10 + $0x58] sm:$0xff]
    %v93 = vld [vmem:[#allocation10 + $0x60] sm:$0xff]
    %v94 = vld [vmem:[#allocation10 + $0x68] sm:$0xff]
    %v95 = vld [vmem:[#allocation10 + $0x70] sm:$0xff]
    %v96 = vld [vmem:[#allocation10 + $0x78] sm:$0xff]
    %v97 = vld [vmem:[#allocation10 + $0x80] sm:$0xff]
    %v98 = vld [vmem:[#allocation10 + $0x88] sm:$0xff]
    %v99 = vld [vmem:[#allocation10 + $0x90] sm:$0xff]
    %v100 = vld [vmem:[#allocation10 + $0x98] sm:$0xff]
    %v101 = vld [vmem:[#allocation10 + $0xa0] sm:$0xff]
    %v102 = vld [vmem:[#allocation10 + $0xa8] sm:$0xff]
    %v103 = vld [vmem:[#allocation10 + $0xb0] sm:$0xff]
    %v104 = vld [vmem:[#allocation10 + $0xb8] sm:$0xff]
    %v105 = vld [vmem:[#allocation10 + $0xc0] sm:$0xff]
    %v106 = vld [vmem:[#allocation10 + $0xc8] sm:$0xff]
    %v107 = vld [vmem:[#allocation10 + $0xd0] sm:$0xff]
    %v108 = vld [vmem:[#allocation10 + $0xd8] sm:$0xff]
    %v109 = vld [vmem:[#allocation10 + $0xe0] sm:$0xff]
    %v110 = vld [vmem:[#allocation10 + $0xe8] sm:$0xff]
    %v111 = vld [vmem:[#allocation10 + $0xf0] sm:$0xff]
    %v112 = vld [vmem:[#allocation10 + $0xf8] sm:$0xff]
    %v113 = vld [vmem:[#allocation2] sm:$0xff]
    %v114 = vld [vmem:[#allocation3] sm:$0xff]
    %v115 = vpack.c.bf16 %v113, %v113
    %v116 = vld [vmem:[#allocation4] sm:$0xff]
    %v117 = vld [vmem:[#allocation4 + $0x8] sm:$0xff]
    %v118 = vld [vmem:[#allocation4 + $0x10] sm:$0xff]
    %v119 = vld [vmem:[#allocation4 + $0x18] sm:$0xff]
    %v152 = vunpack.c.l.b16 %v81
    %v153 = vunpack.c.h.b16 %v81
    %v154 = vunpack.c.l.b16 %v82
    %v155 = vunpack.c.h.b16 %v82
    %v156 = vunpack.c.l.b16 %v83
    %v157 = vunpack.c.h.b16 %v83
    %v158 = vunpack.c.l.b16 %v84
    %v159 = vunpack.c.h.b16 %v84
    %v160 = vunpack.c.l.b16 %v85
    %v161 = vunpack.c.h.b16 %v85
    %v162 = vunpack.c.l.b16 %v86
    %v163 = vunpack.c.h.b16 %v86
    %v164 = vunpack.c.l.b16 %v87
    %v165 = vunpack.c.h.b16 %v87
    %v166 = vunpack.c.l.b16 %v88
    %v167 = vunpack.c.h.b16 %v88
    %v168 = vunpack.c.l.b16 %v89
    %v169 = vunpack.c.h.b16 %v89
    %v170 = vunpack.c.l.b16 %v90
    %v171 = vunpack.c.h.b16 %v90
    %v172 = vunpack.c.l.b16 %v91
    %v173 = vunpack.c.h.b16 %v91
    %v174 = vunpack.c.l.b16 %v92
    %v175 = vunpack.c.h.b16 %v92
    %v176 = vunpack.c.l.b16 %v93
    %v177 = vunpack.c.h.b16 %v93
    %v178 = vunpack.c.l.b16 %v94
    %v179 = vunpack.c.h.b16 %v94
    %v180 = vunpack.c.l.b16 %v95
    %v181 = vunpack.c.h.b16 %v95
    %v182 = vunpack.c.l.b16 %v96
    %v183 = vunpack.c.h.b16 %v96
    %v184 = vunpack.c.l.b16 %v97
    %v185 = vunpack.c.h.b16 %v97
    %v186 = vunpack.c.l.b16 %v98
    %v187 = vunpack.c.h.b16 %v98
    %v188 = vunpack.c.l.b16 %v99
    %v189 = vunpack.c.h.b16 %v99
    %v190 = vunpack.c.l.b16 %v100
    %v191 = vunpack.c.h.b16 %v100
    %v192 = vunpack.c.l.b16 %v101
    %v193 = vunpack.c.h.b16 %v101
    %v194 = vunpack.c.l.b16 %v102
    %v195 = vunpack.c.h.b16 %v102
    %v196 = vunpack.c.l.b16 %v103
    %v197 = vunpack.c.h.b16 %v103
    %v198 = vunpack.c.l.b16 %v104
    %v199 = vunpack.c.h.b16 %v104
    %v200 = vunpack.c.l.b16 %v105
    %v201 = vunpack.c.h.b16 %v105
    %v202 = vunpack.c.l.b16 %v106
    %v203 = vunpack.c.h.b16 %v106
    %v204 = vunpack.c.l.b16 %v107
    %v205 = vunpack.c.h.b16 %v107
    %v206 = vunpack.c.l.b16 %v108
    %v207 = vunpack.c.h.b16 %v108
    %v208 = vunpack.c.l.b16 %v109
    %v209 = vunpack.c.h.b16 %v109
    %v210 = vunpack.c.l.b16 %v110
    %v211 = vunpack.c.h.b16 %v110
    %v212 = vunpack.c.l.b16 %v111
    %v213 = vunpack.c.h.b16 %v111
    %v214 = vunpack.c.l.b16 %v112
    %v215 = vunpack.c.h.b16 %v112
    %v216 = vpack.c.b16 %v156, %v152
    %v217 = vpack.c.b16 %v157, %v153
    %v218 = vpack.c.b16 %v158, %v154
    %v219 = vpack.c.b16 %v159, %v155
    %v220 = vpack.c.b16 %v164, %v160
    %v221 = vpack.c.b16 %v165, %v161
    %v222 = vpack.c.b16 %v166, %v162
    %v223 = vpack.c.b16 %v167, %v163
    %v224 = vpack.c.b16 %v172, %v168
    %v225 = vpack.c.b16 %v173, %v169
    %v226 = vpack.c.b16 %v174, %v170
    %v227 = vpack.c.b16 %v175, %v171
    %v228 = vpack.c.b16 %v180, %v176
    %v229 = vpack.c.b16 %v181, %v177
    %v230 = vpack.c.b16 %v182, %v178
    %v231 = vpack.c.b16 %v183, %v179
    %v232 = vpack.c.b16 %v188, %v184
    %v233 = vpack.c.b16 %v189, %v185
    %v234 = vpack.c.b16 %v190, %v186
    %v235 = vpack.c.b16 %v191, %v187
    %v236 = vpack.c.b16 %v196, %v192
    %v237 = vpack.c.b16 %v197, %v193
    %v238 = vpack.c.b16 %v198, %v194
    %v239 = vpack.c.b16 %v199, %v195
    %v240 = vpack.c.b16 %v204, %v200
    %v241 = vpack.c.b16 %v205, %v201
    %v242 = vpack.c.b16 %v206, %v202
    %v243 = vpack.c.b16 %v207, %v203
    %v244 = vpack.c.b16 %v212, %v208
    %v245 = vpack.c.b16 %v213, %v209
    %v246 = vpack.c.b16 %v214, %v210
    %v247 = vpack.c.b16 %v215, %v211
    %280 = vmatprep.subr.bf16.mxu0 %v217
    %281 = vmatpush1.bf16.msra.mxu0 %v216
    %282 = vmatprep.subr.bf16.mxu0 %v221
    %283 = vmatpush1.bf16.msra.mxu0 %v220
    %284 = vmatprep.subr.bf16.mxu0 %v225
    %285 = vmatpush1.bf16.msra.mxu0 %v224
    %286 = vmatprep.subr.bf16.mxu0 %v229
    %287 = vmatpush1.bf16.msra.mxu0 %v228
    %288 = vmatprep.subr.bf16.mxu0 %v233
    %289 = vmatpush1.bf16.msra.mxu0 %v232
    %290 = vmatprep.subr.bf16.mxu0 %v237
    %291 = vmatpush1.bf16.msra.mxu0 %v236
    %292 = vmatprep.subr.bf16.mxu0 %v241
    %293 = vmatpush1.bf16.msra.mxu0 %v240
    %294 = vmatprep.subr.bf16.mxu0 %v245
    %295 = vmatpush1.bf16.msra.mxu0 %v244
    %296 = vmatprep.subr.bf16.mxu0 0
    %297 = vmatpush1.bf16.msra.mxu0 0
    %298 = vmatprep.subr.bf16.mxu0 0
    %299 = vmatpush1.bf16.msra.mxu0 0
    %300 = vmatprep.subr.bf16.mxu0 0
    %301 = vmatpush1.bf16.msra.mxu0 0
    %302 = vmatprep.subr.bf16.mxu0 0
    %303 = vmatpush1.bf16.msra.mxu0 0
    %304 = vmatprep.subr.bf16.mxu0 0
    %305 = vmatpush1.bf16.msra.mxu0 0
    %306 = vmatprep.subr.bf16.mxu0 0
    %307 = vmatpush1.bf16.msra.mxu0 0
    %308 = vmatprep.subr.bf16.mxu0 0
    %309 = vmatpush1.bf16.msra.mxu0 0
    %310 = vmatprep.subr.bf16.mxu0 0
    %311 = vmatpush1.bf16.msra.mxu0 0
    %312 = vmatprep.mubr.bf16.mxu0 0
    %313 = vmatmul.mubr.bf16.gmra.mrb[0].mxu0 %v115
    %v314 = vpop.f32.mrb[0].mxu0
    %v315 = vadd.f32 %v116, %v314
    %v316 = vpop.f32.mrb[0].mxu0
    %v317 = vadd.f32 %v117, %v316
    %v318 = vpop.f32.mrb[0].mxu0
    %v319 = vpop.f32.mrb[0].mxu0
    %320 = vdwg.mxu0
    %321 = vmatprep.subr.bf16.mxu0 %v219
    %322 = vmatpush1.bf16.msra.mxu0 %v218
    %323 = vmatprep.subr.bf16.mxu0 %v223
    %324 = vmatpush1.bf16.msra.mxu0 %v222
    %325 = vmatprep.subr.bf16.mxu0 %v227
    %326 = vmatpush1.bf16.msra.mxu0 %v226
    %327 = vmatprep.subr.bf16.mxu0 %v231
    %328 = vmatpush1.bf16.msra.mxu0 %v230
    %329 = vmatprep.subr.bf16.mxu0 %v235
    %330 = vmatpush1.bf16.msra.mxu0 %v234
    %331 = vmatprep.subr.bf16.mxu0 %v239
    %332 = vmatpush1.bf16.msra.mxu0 %v238
    %333 = vmatprep.subr.bf16.mxu0 %v243
    %334 = vmatpush1.bf16.msra.mxu0 %v242
    %335 = vmatprep.subr.bf16.mxu0 %v247
    %336 = vmatpush1.bf16.msra.mxu0 %v246
    %337 = vmatprep.subr.bf16.mxu0 0
    %338 = vmatpush1.bf16.msra.mxu0 0
    %339 = vmatprep.subr.bf16.mxu0 0
    %340 = vmatpush1.bf16.msra.mxu0 0
    %341 = vmatprep.subr.bf16.mxu0 0
    %342 = vmatpush1.bf16.msra.mxu0 0
    %343 = vmatprep.subr.bf16.mxu0 0
    %344 = vmatpush1.bf16.msra.mxu0 0
    %345 = vmatprep.subr.bf16.mxu0 0
    %346 = vmatpush1.bf16.msra.mxu0 0
    %347 = vmatprep.subr.bf16.mxu0 0
    %348 = vmatpush1.bf16.msra.mxu0 0
    %349 = vmatprep.subr.bf16.mxu0 0
    %350 = vmatpush1.bf16.msra.mxu0 0
    %351 = vmatprep.subr.bf16.mxu0 0
    %352 = vmatpush1.bf16.msra.mxu0 0
    %353 = vmatprep.mubr.bf16.mxu0 0
    %354 = vmatmul.mubr.bf16.gmra.mrb[0].mxu0 %v115
    %v355 = vpop.f32.mrb[0].mxu0
    %v356 = vadd.f32 %v118, %v355
    %v357 = vpop.f32.mrb[0].mxu0
    %v358 = vadd.f32 %v119, %v357
    %v359 = vpop.f32.mrb[0].mxu0
    %v360 = vpop.f32.mrb[0].mxu0
    %361 = vdwg.mxu0
    %v362 = vxor.u32 %v315, 2147483648
    %v363 = vmul.f32 %v362, 1.442695
    %v364 = vpow.pop %v363
    %v365 = vadd.f32 %v364, 1.0
    %v366 = vrcp.pop %v365
    %v367 = vmul.f32 1.0, %v366
    %v368 = vxor.u32 %v317, 2147483648
    %v369 = vmul.f32 %v368, 1.442695
    %v370 = vpow.pop %v369
    %v371 = vadd.f32 %v370, 1.0
    %v372 = vrcp.pop %v371
    %v373 = vmul.f32 1.0, %v372
    %v374 = vtanh.pop %v356
    %v375 = vxor.u32 %v358, 2147483648
    %v376 = vmul.f32 %v375, 1.442695
    %v377 = vpow.pop %v376
    %v378 = vadd.f32 %v377, 1.0
    %v379 = vrcp.pop %v378
    %v380 = vmul.f32 1.0, %v379
    %v381 = vmul.f32 %v373, %v114
    %v382 = vmul.f32 %v367, %v374
    %v383 = vadd.f32 %v381, %v382
    %v384 = vtanh.pop %v383
    %v385 = vmul.f32 %v380, %v384
    %386 = vst [vmem:[#allocation12] sm:$0xff] %v385
    %387 = vst [vmem:[#allocation13] sm:$0xff] %v383
    %v388 = vpack.c.bf16 %v385, %v385
    %s389 = scalar_lea.vmem [#allocation4], 32
    %v390 = vld [vmem:[%s389] sm:$0xff]
    %v391 = vld [vmem:[%s389 + $0x8] sm:$0xff]
    %v392 = vld [vmem:[%s389 + $0x10] sm:$0xff]
    %v393 = vld [vmem:[%s389 + $0x18] sm:$0xff]
    %394 = vmatprep.subr.bf16.mxu0 %v217
    %395 = vmatpush1.bf16.msra.mxu0 %v216
    %396 = vmatprep.subr.bf16.mxu0 %v221
    %397 = vmatpush1.bf16.msra.mxu0 %v220
    %398 = vmatprep.subr.bf16.mxu0 %v225
    %399 = vmatpush1.bf16.msra.mxu0 %v224
    %400 = vmatprep.subr.bf16.mxu0 %v229
    %401 = vmatpush1.bf16.msra.mxu0 %v228
    %402 = vmatprep.subr.bf16.mxu0 %v233
    %403 = vmatpush1.bf16.msra.mxu0 %v232
    %404 = vmatprep.subr.bf16.mxu0 %v237
    %405 = vmatpush1.bf16.msra.mxu0 %v236
    %406 = vmatprep.subr.bf16.mxu0 %v241
    %407 = vmatpush1.bf16.msra.mxu0 %v240
    %408 = vmatprep.subr.bf16.mxu0 %v245
    %409 = vmatpush1.bf16.msra.mxu0 %v244
    %410 = vmatprep.subr.bf16.mxu0 0
    %411 = vmatpush1.bf16.msra.mxu0 0
    %412 = vmatprep.subr.bf16.mxu0 0
    %413 = vmatpush1.bf16.msra.mxu0 0
    %414 = vmatprep.subr.bf16.mxu0 0
    %415 = vmatpush1.bf16.msra.mxu0 0
    %416 = vmatprep.subr.bf16.mxu0 0
    %417 = vmatpush1.bf16.msra.mxu0 0
    %418 = vmatprep.subr.bf16.mxu0 0
    %419 = vmatpush1.bf16.msra.mxu0 0
    %420 = vmatprep.subr.bf16.mxu0 0
    %421 = vmatpush1.bf16.msra.mxu0 0
    %422 = vmatprep.subr.bf16.mxu0 0
    %423 = vmatpush1.bf16.msra.mxu0 0
    %424 = vmatprep.subr.bf16.mxu0 0
    %425 = vmatpush1.bf16.msra.mxu0 0
    %426 = vmatprep.mubr.bf16.mxu0 0
    %427 = vmatmul.mubr.bf16.gmra.mrb[0].mxu0 %v388
    %v428 = vpop.f32.mrb[0].mxu0
    %v429 = vadd.f32 %v390, %v428
    %v430 = vpop.f32.mrb[0].mxu0
    %v431 = vadd.f32 %v391, %v430
    %v432 = vpop.f32.mrb[0].mxu0
    %v433 = vpop.f32.mrb[0].mxu0
    %434 = vdwg.mxu0
    %435 = vmatprep.subr.bf16.mxu0 %v219
    %436 = vmatpush1.bf16.msra.mxu0 %v218
    %437 = vmatprep.subr.bf16.mxu0 %v223
    %438 = vmatpush1.bf16.msra.mxu0 %v222
    %439 = vmatprep.subr.bf16.mxu0 %v227
    %440 = vmatpush1.bf16.msra.mxu0 %v226
    %441 = vmatprep.subr.bf16.mxu0 %v231
    %442 = vmatpush1.bf16.msra.mxu0 %v230
    %443 = vmatprep.subr.bf16.mxu0 %v235
    %444 = vmatpush1.bf16.msra.mxu0 %v234
    %445 = vmatprep.subr.bf16.mxu0 %v239
    %446 = vmatpush1.bf16.msra.mxu0 %v238
    %447 = vmatprep.subr.bf16.mxu0 %v243
    %448 = vmatpush1.bf16.msra.mxu0 %v242
    %449 = vmatprep.subr.bf16.mxu0 %v247
    %450 = vmatpush1.bf16.msra.mxu0 %v246
    %451 = vmatprep.subr.bf16.mxu0 0
    %452 = vmatpush1.bf16.msra.mxu0 0
    %453 = vmatprep.subr.bf16.mxu0 0
    %454 = vmatpush1.bf16.msra.mxu0 0
    %455 = vmatprep.subr.bf16.mxu0 0
    %456 = vmatpush1.bf16.msra.mxu0 0
    %457 = vmatprep.subr.bf16.mxu0 0
    %458 = vmatpush1.bf16.msra.mxu0 0
    %459 = vmatprep.subr.bf16.mxu0 0
    %460 = vmatpush1.bf16.msra.mxu0 0
    %461 = vmatprep.subr.bf16.mxu0 0
    %462 = vmatpush1.bf16.msra.mxu0 0
    %463 = vmatprep.subr.bf16.mxu0 0
    %464 = vmatpush1.bf16.msra.mxu0 0
    %465 = vmatprep.subr.bf16.mxu0 0
    %466 = vmatpush1.bf16.msra.mxu0 0
    %467 = vmatprep.mubr.bf16.mxu0 0
    %468 = vmatmul.mubr.bf16.gmra.mrb[0].mxu0 %v388
    %v469 = vpop.f32.mrb[0].mxu0
    %v470 = vadd.f32 %v392, %v469
    %v471 = vpop.f32.mrb[0].mxu0
    %v472 = vadd.f32 %v393, %v471
    %v473 = vpop.f32.mrb[0].mxu0
    %v474 = vpop.f32.mrb[0].mxu0
    %475 = vdwg.mxu0
    %v476 = vxor.u32 %v429, 2147483648
    %v477 = vmul.f32 %v476, 1.442695
    %v478 = vpow.pop %v477
    %v479 = vadd.f32 %v478, 1.0
    %v480 = vrcp.pop %v479
    %v481 = vmul.f32 1.0, %v480
    %v482 = vxor.u32 %v431, 2147483648
    %v483 = vmul.f32 %v482, 1.442695
    %v484 = vpow.pop %v483
    %v485 = vadd.f32 %v484, 1.0
    %v486 = vrcp.pop %v485
    %v487 = vmul.f32 1.0, %v486
    %v488 = vtanh.pop %v470
    %v489 = vxor.u32 %v472, 2147483648
    %v490 = vmul.f32 %v489, 1.442695
    %v491 = vpow.pop %v490
    %v492 = vadd.f32 %v491, 1.0
    %v493 = vrcp.pop %v492
    %v494 = vmul.f32 1.0, %v493
    %v495 = vmul.f32 %v487, %v383
    %v496 = vmul.f32 %v481, %v488
    %v497 = vadd.f32 %v495, %v496
    %v498 = vtanh.pop %v497
    %v499 = vmul.f32 %v494, %v498
    %s500 = scalar_lea.vmem [#allocation12], 8
    %501 = vst [vmem:[%s500] sm:$0xff] %v499
    %s502 = scalar_lea.vmem [#allocation13], 8
    %503 = vst [vmem:[%s502] sm:$0xff] %v497
    %v504 = vpack.c.bf16 %v499, %v499
    %s505 = scalar_lea.vmem [#allocation4], 64
    %v506 = vld [vmem:[%s505] sm:$0xff]
    %v507 = vld [vmem:[%s505 + $0x8] sm:$0xff]
    %v508 = vld [vmem:[%s505 + $0x10] sm:$0xff]
    %v509 = vld [vmem:[%s505 + $0x18] sm:$0xff]
    %510 = vmatprep.subr.bf16.mxu0 %v217
    %511 = vmatpush1.bf16.msra.mxu0 %v216
    %512 = vmatprep.subr.bf16.mxu0 %v221
    %513 = vmatpush1.bf16.msra.mxu0 %v220
    %514 = vmatprep.subr.bf16.mxu0 %v225
    %515 = vmatpush1.bf16.msra.mxu0 %v224
    %516 = vmatprep.subr.bf16.mxu0 %v229
    %517 = vmatpush1.bf16.msra.mxu0 %v228
    %518 = vmatprep.subr.bf16.mxu0 %v233
    %519 = vmatpush1.bf16.msra.mxu0 %v232
    %520 = vmatprep.subr.bf16.mxu0 %v237
    %521 = vmatpush1.bf16.msra.mxu0 %v236
    %522 = vmatprep.subr.bf16.mxu0 %v241
    %523 = vmatpush1.bf16.msra.mxu0 %v240
    %524 = vmatprep.subr.bf16.mxu0 %v245
    %525 = vmatpush1.bf16.msra.mxu0 %v244
    %526 = vmatprep.subr.bf16.mxu0 0
    %527 = vmatpush1.bf16.msra.mxu0 0
    %528 = vmatprep.subr.bf16.mxu0 0
    %529 = vmatpush1.bf16.msra.mxu0 0
    %530 = vmatprep.subr.bf16.mxu0 0
    %531 = vmatpush1.bf16.msra.mxu0 0
    %532 = vmatprep.subr.bf16.mxu0 0
    %533 = vmatpush1.bf16.msra.mxu0 0
    %534 = vmatprep.subr.bf16.mxu0 0
    %535 = vmatpush1.bf16.msra.mxu0 0
    %536 = vmatprep.subr.bf16.mxu0 0
    %537 = vmatpush1.bf16.msra.mxu0 0
    %538 = vmatprep.subr.bf16.mxu0 0
    %539 = vmatpush1.bf16.msra.mxu0 0
    %540 = vmatprep.subr.bf16.mxu0 0
    %541 = vmatpush1.bf16.msra.mxu0 0
    %542 = vmatprep.mubr.bf16.mxu0 0
    %543 = vmatmul.mubr.bf16.gmra.mrb[0].mxu0 %v504
    %v544 = vpop.f32.mrb[0].mxu0
    %v545 = vadd.f32 %v506, %v544
    %v546 = vpop.f32.mrb[0].mxu0
    %v547 = vadd.f32 %v507, %v546
    %v548 = vpop.f32.mrb[0].mxu0
    %v549 = vpop.f32.mrb[0].mxu0
    %550 = vdwg.mxu0
    %551 = vmatprep.subr.bf16.mxu0 %v219
    %552 = vmatpush1.bf16.msra.mxu0 %v218
    %553 = vmatprep.subr.bf16.mxu0 %v223
    %554 = vmatpush1.bf16.msra.mxu0 %v222
    %555 = vmatprep.subr.bf16.mxu0 %v227
    %556 = vmatpush1.bf16.msra.mxu0 %v226
    %557 = vmatprep.subr.bf16.mxu0 %v231
    %558 = vmatpush1.bf16.msra.mxu0 %v230
    %559 = vmatprep.subr.bf16.mxu0 %v235
    %560 = vmatpush1.bf16.msra.mxu0 %v234
    %561 = vmatprep.subr.bf16.mxu0 %v239
    %562 = vmatpush1.bf16.msra.mxu0 %v238
    %563 = vmatprep.subr.bf16.mxu0 %v243
    %564 = vmatpush1.bf16.msra.mxu0 %v242
    %565 = vmatprep.subr.bf16.mxu0 %v247
    %566 = vmatpush1.bf16.msra.mxu0 %v246
    %567 = vmatprep.subr.bf16.mxu0 0
    %568 = vmatpush1.bf16.msra.mxu0 0
    %569 = vmatprep.subr.bf16.mxu0 0
    %570 = vmatpush1.bf16.msra.mxu0 0
    %571 = vmatprep.subr.bf16.mxu0 0
    %572 = vmatpush1.bf16.msra.mxu0 0
    %573 = vmatprep.subr.bf16.mxu0 0
    %574 = vmatpush1.bf16.msra.mxu0 0
    %575 = vmatprep.subr.bf16.mxu0 0
    %576 = vmatpush1.bf16.msra.mxu0 0
    %577 = vmatprep.subr.bf16.mxu0 0
    %578 = vmatpush1.bf16.msra.mxu0 0
    %579 = vmatprep.subr.bf16.mxu0 0
    %580 = vmatpush1.bf16.msra.mxu0 0
    %581 = vmatprep.subr.bf16.mxu0 0
    %582 = vmatpush1.bf16.msra.mxu0 0
    %583 = vmatprep.mubr.bf16.mxu0 0
    %584 = vmatmul.mubr.bf16.gmra.mrb[0].mxu0 %v504
    %v585 = vpop.f32.mrb[0].mxu0
    %v586 = vadd.f32 %v508, %v585
    %v587 = vpop.f32.mrb[0].mxu0
    %v588 = vadd.f32 %v509, %v587
    %v589 = vpop.f32.mrb[0].mxu0
    %v590 = vpop.f32.mrb[0].mxu0
    %591 = vdwg.mxu0
    %v592 = vxor.u32 %v545, 2147483648
    %v593 = vmul.f32 %v592, 1.442695
    %v594 = vpow.pop %v593
    %v595 = vadd.f32 %v594, 1.0
    %v596 = vrcp.pop %v595
    %v597 = vmul.f32 1.0, %v596
    %v598 = vxor.u32 %v547, 2147483648
    %v599 = vmul.f32 %v598, 1.442695
    %v600 = vpow.pop %v599
    %v601 = vadd.f32 %v600, 1.0
    %v602 = vrcp.pop %v601
    %v603 = vmul.f32 1.0, %v602
    %v604 = vtanh.pop %v586
    %v605 = vxor.u32 %v588, 2147483648
    %v606 = vmul.f32 %v605, 1.442695
    %v607 = vpow.pop %v606
    %v608 = vadd.f32 %v607, 1.0
    %v609 = vrcp.pop %v608
    %v610 = vmul.f32 1.0, %v609
    %v611 = vmul.f32 %v603, %v497
    %v612 = vmul.f32 %v597, %v604
    %v613 = vadd.f32 %v611, %v612
    %v614 = vtanh.pop %v613
    %v615 = vmul.f32 %v610, %v614
    %s616 = scalar_lea.vmem [#allocation12], 16
    %617 = vst [vmem:[%s616] sm:$0xff] %v615
    %s618 = scalar_lea.vmem [#allocation13], 16
    %619 = vst [vmem:[%s618] sm:$0xff] %v613
    %v620 = vpack.c.bf16 %v615, %v615
    %s621 = scalar_lea.vmem [#allocation4], 96
    %v622 = vld [vmem:[%s621] sm:$0xff]
    %v623 = vld [vmem:[%s621 + $0x8] sm:$0xff]
    %v624 = vld [vmem:[%s621 + $0x10] sm:$0xff]
    %v625 = vld [vmem:[%s621 + $0x18] sm:$0xff]
    %626 = vmatprep.subr.bf16.mxu0 %v217
    %627 = vmatpush1.bf16.msra.mxu0 %v216
    %628 = vmatprep.subr.bf16.mxu0 %v221
    %629 = vmatpush1.bf16.msra.mxu0 %v220
    %630 = vmatprep.subr.bf16.mxu0 %v225
    %631 = vmatpush1.bf16.msra.mxu0 %v224
    %632 = vmatprep.subr.bf16.mxu0 %v229
    %633 = vmatpush1.bf16.msra.mxu0 %v228
    %634 = vmatprep.subr.bf16.mxu0 %v233
    %635 = vmatpush1.bf16.msra.mxu0 %v232
    %636 = vmatprep.subr.bf16.mxu0 %v237
    %637 = vmatpush1.bf16.msra.mxu0 %v236
    %638 = vmatprep.subr.bf16.mxu0 %v241
    %639 = vmatpush1.bf16.msra.mxu0 %v240
    %640 = vmatprep.subr.bf16.mxu0 %v245
    %641 = vmatpush1.bf16.msra.mxu0 %v244
    %642 = vmatprep.subr.bf16.mxu0 0
    %643 = vmatpush1.bf16.msra.mxu0 0
    %644 = vmatprep.subr.bf16.mxu0 0
    %645 = vmatpush1.bf16.msra.mxu0 0
    %646 = vmatprep.subr.bf16.mxu0 0
    %647 = vmatpush1.bf16.msra.mxu0 0
    %648 = vmatprep.subr.bf16.mxu0 0
    %649 = vmatpush1.bf16.msra.mxu0 0
    %650 = vmatprep.subr.bf16.mxu0 0
    %651 = vmatpush1.bf16.msra.mxu0 0
    %652 = vmatprep.subr.bf16.mxu0 0
    %653 = vmatpush1.bf16.msra.mxu0 0
    %654 = vmatprep.subr.bf16.mxu0 0
    %655 = vmatpush1.bf16.msra.mxu0 0
    %656 = vmatprep.subr.bf16.mxu0 0
    %657 = vmatpush1.bf16.msra.mxu0 0
    %658 = vmatprep.mubr.bf16.mxu0 0
    %659 = vmatmul.mubr.bf16.gmra.mrb[0].mxu0 %v620
    %v660 = vpop.f32.mrb[0].mxu0
    %v661 = vadd.f32 %v622, %v660
    %v662 = vpop.f32.mrb[0].mxu0
    %v663 = vadd.f32 %v623, %v662
    %v664 = vpop.f32.mrb[0].mxu0
    %v665 = vpop.f32.mrb[0].mxu0
    %666 = vdwg.mxu0
    %667 = vmatprep.subr.bf16.mxu0 %v219
    %668 = vmatpush1.bf16.msra.mxu0 %v218
    %669 = vmatprep.subr.bf16.mxu0 %v223
    %670 = vmatpush1.bf16.msra.mxu0 %v222
    %671 = vmatprep.subr.bf16.mxu0 %v227
    %672 = vmatpush1.bf16.msra.mxu0 %v226
    %673 = vmatprep.subr.bf16.mxu0 %v231
    %674 = vmatpush1.bf16.msra.mxu0 %v230
    %675 = vmatprep.subr.bf16.mxu0 %v235
    %676 = vmatpush1.bf16.msra.mxu0 %v234
    %677 = vmatprep.subr.bf16.mxu0 %v239
    %678 = vmatpush1.bf16.msra.mxu0 %v238
    %679 = vmatprep.subr.bf16.mxu0 %v243
    %680 = vmatpush1.bf16.msra.mxu0 %v242
    %681 = vmatprep.subr.bf16.mxu0 %v247
    %682 = vmatpush1.bf16.msra.mxu0 %v246
    %683 = vmatprep.subr.bf16.mxu0 0
    %684 = vmatpush1.bf16.msra.mxu0 0
    %685 = vmatprep.subr.bf16.mxu0 0
    %686 = vmatpush1.bf16.msra.mxu0 0
    %687 = vmatprep.subr.bf16.mxu0 0
    %688 = vmatpush1.bf16.msra.mxu0 0
    %689 = vmatprep.subr.bf16.mxu0 0
    %690 = vmatpush1.bf16.msra.mxu0 0
    %691 = vmatprep.subr.bf16.mxu0 0
    %692 = vmatpush1.bf16.msra.mxu0 0
    %693 = vmatprep.subr.bf16.mxu0 0
    %694 = vmatpush1.bf16.msra.mxu0 0
    %695 = vmatprep.subr.bf16.mxu0 0
    %696 = vmatpush1.bf16.msra.mxu0 0
    %697 = vmatprep.subr.bf16.mxu0 0
    %698 = vmatpush1.bf16.msra.mxu0 0
    %699 = vmatprep.mubr.bf16.mxu0 0
    %700 = vmatmul.mubr.bf16.gmra.mrb[0].mxu0 %v620
    %v701 = vpop.f32.mrb[0].mxu0
    %v702 = vadd.f32 %v624, %v701
    %v703 = vpop.f32.mrb[0].mxu0
    %v704 = vadd.f32 %v625, %v703
    %v705 = vpop.f32.mrb[0].mxu0
    %v706 = vpop.f32.mrb[0].mxu0
    %707 = vdwg.mxu0
    %v708 = vxor.u32 %v661, 2147483648
    %v709 = vmul.f32 %v708, 1.442695
    %v710 = vpow.pop %v709
    %v711 = vadd.f32 %v710, 1.0
    %v712 = vrcp.pop %v711
    %v713 = vmul.f32 1.0, %v712
    %v714 = vxor.u32 %v663, 2147483648
    %v715 = vmul.f32 %v714, 1.442695
    %v716 = vpow.pop %v715
    %v717 = vadd.f32 %v716, 1.0
    %v718 = vrcp.pop %v717
    %v719 = vmul.f32 1.0, %v718
    %v720 = vtanh.pop %v702
    %v721 = vxor.u32 %v704, 2147483648
    %v722 = vmul.f32 %v721, 1.442695
    %v723 = vpow.pop %v722
    %v724 = vadd.f32 %v723, 1.0
    %v725 = vrcp.pop %v724
    %v726 = vmul.f32 1.0, %v725
    %v727 = vmul.f32 %v719, %v613
    %v728 = vmul.f32 %v713, %v720
    %v729 = vadd.f32 %v727, %v728
    %v730 = vtanh.pop %v729
    %v731 = vmul.f32 %v726, %v730
    %s732 = scalar_lea.vmem [#allocation12], 24
    %733 = vst [vmem:[%s732] sm:$0xff] %v731
    %s734 = scalar_lea.vmem [#allocation13], 24
    %735 = vst [vmem:[%s734] sm:$0xff] %v729
    %v736 = vpack.c.bf16 %v731, %v731
    %s737 = scalar_lea.vmem [#allocation4], 128
    %v738 = vld [vmem:[%s737] sm:$0xff]
    %v739 = vld [vmem:[%s737 + $0x8] sm:$0xff]
    %v740 = vld [vmem:[%s737 + $0x10] sm:$0xff]
    %v741 = vld [vmem:[%s737 + $0x18] sm:$0xff]
    %742 = vmatprep.subr.bf16.mxu0 %v217
    %743 = vmatpush1.bf16.msra.mxu0 %v216
    %744 = vmatprep.subr.bf16.mxu0 %v221
    %745 = vmatpush1.bf16.msra.mxu0 %v220
    %746 = vmatprep.subr.bf16.mxu0 %v225
    %747 = vmatpush1.bf16.msra.mxu0 %v224
    %748 = vmatprep.subr.bf16.mxu0 %v229
    %749 = vmatpush1.bf16.msra.mxu0 %v228
    %750 = vmatprep.subr.bf16.mxu0 %v233
    %751 = vmatpush1.bf16.msra.mxu0 %v232
    %752 = vmatprep.subr.bf16.mxu0 %v237
    %753 = vmatpush1.bf16.msra.mxu0 %v236
    %754 = vmatprep.subr.bf16.mxu0 %v241
    %755 = vmatpush1.bf16.msra.mxu0 %v240
    %756 = vmatprep.subr.bf16.mxu0 %v245
    %757 = vmatpush1.bf16.msra.mxu0 %v244
    %758 = vmatprep.subr.bf16.mxu0 0
    %759 = vmatpush1.bf16.msra.mxu0 0
    %760 = vmatprep.subr.bf16.mxu0 0
    %761 = vmatpush1.bf16.msra.mxu0 0
    %762 = vmatprep.subr.bf16.mxu0 0
    %763 = vmatpush1.bf16.msra.mxu0 0
    %764 = vmatprep.subr.bf16.mxu0 0
    %765 = vmatpush1.bf16.msra.mxu0 0
    %766 = vmatprep.subr.bf16.mxu0 0
    %767 = vmatpush1.bf16.msra.mxu0 0
    %768 = vmatprep.subr.bf16.mxu0 0
    %769 = vmatpush1.bf16.msra.mxu0 0
    %770 = vmatprep.subr.bf16.mxu0 0
    %771 = vmatpush1.bf16.msra.mxu0 0
    %772 = vmatprep.subr.bf16.mxu0 0
    %773 = vmatpush1.bf16.msra.mxu0 0
    %774 = vmatprep.mubr.bf16.mxu0 0
    %775 = vmatmul.mubr.bf16.gmra.mrb[0].mxu0 %v736
    %v776 = vpop.f32.mrb[0].mxu0
    %v777 = vadd.f32 %v738, %v776
    %v778 = vpop.f32.mrb[0].mxu0
    %v779 = vadd.f32 %v739, %v778
    %v780 = vpop.f32.mrb[0].mxu0
    %v781 = vpop.f32.mrb[0].mxu0
    %782 = vdwg.mxu0
    %783 = vmatprep.subr.bf16.mxu0 %v219
    %784 = vmatpush1.bf16.msra.mxu0 %v218
    %785 = vmatprep.subr.bf16.mxu0 %v223
    %786 = vmatpush1.bf16.msra.mxu0 %v222
    %787 = vmatprep.subr.bf16.mxu0 %v227
    %788 = vmatpush1.bf16.msra.mxu0 %v226
    %789 = vmatprep.subr.bf16.mxu0 %v231
    %790 = vmatpush1.bf16.msra.mxu0 %v230
    %791 = vmatprep.subr.bf16.mxu0 %v235
    %792 = vmatpush1.bf16.msra.mxu0 %v234
    %793 = vmatprep.subr.bf16.mxu0 %v239
    %794 = vmatpush1.bf16.msra.mxu0 %v238
    %795 = vmatprep.subr.bf16.mxu0 %v243
    %796 = vmatpush1.bf16.msra.mxu0 %v242
    %797 = vmatprep.subr.bf16.mxu0 %v247
    %798 = vmatpush1.bf16.msra.mxu0 %v246
    %799 = vmatprep.subr.bf16.mxu0 0
    %800 = vmatpush1.bf16.msra.mxu0 0
    %801 = vmatprep.subr.bf16.mxu0 0
    %802 = vmatpush1.bf16.msra.mxu0 0
    %803 = vmatprep.subr.bf16.mxu0 0
    %804 = vmatpush1.bf16.msra.mxu0 0
    %805 = vmatprep.subr.bf16.mxu0 0
    %806 = vmatpush1.bf16.msra.mxu0 0
    %807 = vmatprep.subr.bf16.mxu0 0
    %808 = vmatpush1.bf16.msra.mxu0 0
    %809 = vmatprep.subr.bf16.mxu0 0
    %810 = vmatpush1.bf16.msra.mxu0 0
    %811 = vmatprep.subr.bf16.mxu0 0
    %812 = vmatpush1.bf16.msra.mxu0 0
    %813 = vmatprep.subr.bf16.mxu0 0
    %814 = vmatpush1.bf16.msra.mxu0 0
    %815 = vmatprep.mubr.bf16.mxu0 0
    %816 = vmatmul.mubr.bf16.gmra.mrb[0].mxu0 %v736
    %v817 = vpop.f32.mrb[0].mxu0
    %v818 = vadd.f32 %v740, %v817
    %v819 = vpop.f32.mrb[0].mxu0
    %v820 = vadd.f32 %v741, %v819
    %v821 = vpop.f32.mrb[0].mxu0
    %v822 = vpop.f32.mrb[0].mxu0
    %823 = vdwg.mxu0
    %v824 = vxor.u32 %v777, 2147483648
    %v825 = vmul.f32 %v824, 1.442695
    %v826 = vpow.pop %v825
    %v827 = vadd.f32 %v826, 1.0
    %v828 = vrcp.pop %v827
    %v829 = vmul.f32 1.0, %v828
    %v830 = vxor.u32 %v779, 2147483648
    %v831 = vmul.f32 %v830, 1.442695
    %v832 = vpow.pop %v831
    %v833 = vadd.f32 %v832, 1.0
    %v834 = vrcp.pop %v833
    %v835 = vmul.f32 1.0, %v834
    %v836 = vtanh.pop %v818
    %v837 = vxor.u32 %v820, 2147483648
    %v838 = vmul.f32 %v837, 1.442695
    %v839 = vpow.pop %v838
    %v840 = vadd.f32 %v839, 1.0
    %v841 = vrcp.pop %v840
    %v842 = vmul.f32 1.0, %v841
    %v843 = vmul.f32 %v835, %v729
    %v844 = vmul.f32 %v829, %v836
    %v845 = vadd.f32 %v843, %v844
    %v846 = vtanh.pop %v845
    %v847 = vmul.f32 %v842, %v846
    %s848 = scalar_lea.vmem [#allocation12], 32
    %849 = vst [vmem:[%s848] sm:$0xff] %v847
    %s850 = scalar_lea.vmem [#allocation13], 32
    %851 = vst [vmem:[%s850] sm:$0xff] %v845
    %v852 = vpack.c.bf16 %v847, %v847
    %s853 = scalar_lea.vmem [#allocation4], 160
    %v854 = vld [vmem:[%s853] sm:$0xff]
    %v855 = vld [vmem:[%s853 + $0x8] sm:$0xff]
    %v856 = vld [vmem:[%s853 + $0x10] sm:$0xff]
    %v857 = vld [vmem:[%s853 + $0x18] sm:$0xff]
    %858 = vmatprep.subr.bf16.mxu0 %v217
    %859 = vmatpush1.bf16.msra.mxu0 %v216
    %860 = vmatprep.subr.bf16.mxu0 %v221
    %861 = vmatpush1.bf16.msra.mxu0 %v220
    %862 = vmatprep.subr.bf16.mxu0 %v225
    %863 = vmatpush1.bf16.msra.mxu0 %v224
    %864 = vmatprep.subr.bf16.mxu0 %v229
    %865 = vmatpush1.bf16.msra.mxu0 %v228
    %866 = vmatprep.subr.bf16.mxu0 %v233
    %867 = vmatpush1.bf16.msra.mxu0 %v232
    %868 = vmatprep.subr.bf16.mxu0 %v237
    %869 = vmatpush1.bf16.msra.mxu0 %v236
    %870 = vmatprep.subr.bf16.mxu0 %v241
    %871 = vmatpush1.bf16.msra.mxu0 %v240
    %872 = vmatprep.subr.bf16.mxu0 %v245
    %873 = vmatpush1.bf16.msra.mxu0 %v244
    %874 = vmatprep.subr.bf16.mxu0 0
    %875 = vmatpush1.bf16.msra.mxu0 0
    %876 = vmatprep.subr.bf16.mxu0 0
    %877 = vmatpush1.bf16.msra.mxu0 0
    %878 = vmatprep.subr.bf16.mxu0 0
    %879 = vmatpush1.bf16.msra.mxu0 0
    %880 = vmatprep.subr.bf16.mxu0 0
    %881 = vmatpush1.bf16.msra.mxu0 0
    %882 = vmatprep.subr.bf16.mxu0 0
    %883 = vmatpush1.bf16.msra.mxu0 0
    %884 = vmatprep.subr.bf16.mxu0 0
    %885 = vmatpush1.bf16.msra.mxu0 0
    %886 = vmatprep.subr.bf16.mxu0 0
    %887 = vmatpush1.bf16.msra.mxu0 0
    %888 = vmatprep.subr.bf16.mxu0 0
    %889 = vmatpush1.bf16.msra.mxu0 0
    %890 = vmatprep.mubr.bf16.mxu0 0
    %891 = vmatmul.mubr.bf16.gmra.mrb[0].mxu0 %v852
    %v892 = vpop.f32.mrb[0].mxu0
    %v893 = vadd.f32 %v854, %v892
    %v894 = vpop.f32.mrb[0].mxu0
    %v895 = vadd.f32 %v855, %v894
    %v896 = vpop.f32.mrb[0].mxu0
    %v897 = vpop.f32.mrb[0].mxu0
    %898 = vdwg.mxu0
    %899 = vmatprep.subr.bf16.mxu0 %v219
    %900 = vmatpush1.bf16.msra.mxu0 %v218
    %901 = vmatprep.subr.bf16.mxu0 %v223
    %902 = vmatpush1.bf16.msra.mxu0 %v222
    %903 = vmatprep.subr.bf16.mxu0 %v227
    %904 = vmatpush1.bf16.msra.mxu0 %v226
    %905 = vmatprep.subr.bf16.mxu0 %v231
    %906 = vmatpush1.bf16.msra.mxu0 %v230
    %907 = vmatprep.subr.bf16.mxu0 %v235
    %908 = vmatpush1.bf16.msra.mxu0 %v234
    %909 = vmatprep.subr.bf16.mxu0 %v239
    %910 = vmatpush1.bf16.msra.mxu0 %v238
    %911 = vmatprep.subr.bf16.mxu0 %v243
    %912 = vmatpush1.bf16.msra.mxu0 %v242
    %913 = vmatprep.subr.bf16.mxu0 %v247
    %914 = vmatpush1.bf16.msra.mxu0 %v246
    %915 = vmatprep.subr.bf16.mxu0 0
    %916 = vmatpush1.bf16.msra.mxu0 0
    %917 = vmatprep.subr.bf16.mxu0 0
    %918 = vmatpush1.bf16.msra.mxu0 0
    %919 = vmatprep.subr.bf16.mxu0 0
    %920 = vmatpush1.bf16.msra.mxu0 0
    %921 = vmatprep.subr.bf16.mxu0 0
    %922 = vmatpush1.bf16.msra.mxu0 0
    %923 = vmatprep.subr.bf16.mxu0 0
    %924 = vmatpush1.bf16.msra.mxu0 0
    %925 = vmatprep.subr.bf16.mxu0 0
    %926 = vmatpush1.bf16.msra.mxu0 0
    %927 = vmatprep.subr.bf16.mxu0 0
    %928 = vmatpush1.bf16.msra.mxu0 0
    %929 = vmatprep.subr.bf16.mxu0 0
    %930 = vmatpush1.bf16.msra.mxu0 0
    %931 = vmatprep.mubr.bf16.mxu0 0
    %932 = vmatmul.mubr.bf16.gmra.mrb[0].mxu0 %v852
    %v933 = vpop.f32.mrb[0].mxu0
    %v934 = vadd.f32 %v856, %v933
    %v935 = vpop.f32.mrb[0].mxu0
    %v936 = vadd.f32 %v857, %v935
    %v937 = vpop.f32.mrb[0].mxu0
    %v938 = vpop.f32.mrb[0].mxu0
    %939 = vdwg.mxu0
    %v940 = vxor.u32 %v893, 2147483648
    %v941 = vmul.f32 %v940, 1.442695
    %v942 = vpow.pop %v941
    %v943 = vadd.f32 %v942, 1.0
    %v944 = vrcp.pop %v943
    %v945 = vmul.f32 1.0, %v944
    %v946 = vxor.u32 %v895, 2147483648
    %v947 = vmul.f32 %v946, 1.442695
    %v948 = vpow.pop %v947
    %v949 = vadd.f32 %v948, 1.0
    %v950 = vrcp.pop %v949
    %v951 = vmul.f32 1.0, %v950
    %v952 = vtanh.pop %v934
    %v953 = vxor.u32 %v936, 2147483648
    %v954 = vmul.f32 %v953, 1.442695
    %v955 = vpow.pop %v954
    %v956 = vadd.f32 %v955, 1.0
    %v957 = vrcp.pop %v956
    %v958 = vmul.f32 1.0, %v957
    %v959 = vmul.f32 %v951, %v845
    %v960 = vmul.f32 %v945, %v952
    %v961 = vadd.f32 %v959, %v960
    %v962 = vtanh.pop %v961
    %v963 = vmul.f32 %v958, %v962
    %s964 = scalar_lea.vmem [#allocation12], 40
    %965 = vst [vmem:[%s964] sm:$0xff] %v963
    %s966 = scalar_lea.vmem [#allocation13], 40
    %967 = vst [vmem:[%s966] sm:$0xff] %v961
    %v968 = vpack.c.bf16 %v963, %v963
    %s969 = scalar_lea.vmem [#allocation4], 192
    %v970 = vld [vmem:[%s969] sm:$0xff]
    %v971 = vld [vmem:[%s969 + $0x8] sm:$0xff]
    %v972 = vld [vmem:[%s969 + $0x10] sm:$0xff]
    %v973 = vld [vmem:[%s969 + $0x18] sm:$0xff]
    %974 = vmatprep.subr.bf16.mxu0 %v217
    %975 = vmatpush1.bf16.msra.mxu0 %v216
    %976 = vmatprep.subr.bf16.mxu0 %v221
    %977 = vmatpush1.bf16.msra.mxu0 %v220
    %978 = vmatprep.subr.bf16.mxu0 %v225
    %979 = vmatpush1.bf16.msra.mxu0 %v224
    %980 = vmatprep.subr.bf16.mxu0 %v229
    %981 = vmatpush1.bf16.msra.mxu0 %v228
    %982 = vmatprep.subr.bf16.mxu0 %v233
    %983 = vmatpush1.bf16.msra.mxu0 %v232
    %984 = vmatprep.subr.bf16.mxu0 %v237
    %985 = vmatpush1.bf16.msra.mxu0 %v236
    %986 = vmatprep.subr.bf16.mxu0 %v241
    %987 = vmatpush1.bf16.msra.mxu0 %v240
    %988 = vmatprep.subr.bf16.mxu0 %v245
    %989 = vmatpush1.bf16.msra.mxu0 %v244
    %990 = vmatprep.subr.bf16.mxu0 0
    %991 = vmatpush1.bf16.msra.mxu0 0
    %992 = vmatprep.subr.bf16.mxu0 0
    %993 = vmatpush1.bf16.msra.mxu0 0
    %994 = vmatprep.subr.bf16.mxu0 0
    %995 = vmatpush1.bf16.msra.mxu0 0
    %996 = vmatprep.subr.bf16.mxu0 0
    %997 = vmatpush1.bf16.msra.mxu0 0
    %998 = vmatprep.subr.bf16.mxu0 0
    %999 = vmatpush1.bf16.msra.mxu0 0
    %1000 = vmatprep.subr.bf16.mxu0 0
    %1001 = vmatpush1.bf16.msra.mxu0 0
    %1002 = vmatprep.subr.bf16.mxu0 0
    %1003 = vmatpush1.bf16.msra.mxu0 0
    %1004 = vmatprep.subr.bf16.mxu0 0
    %1005 = vmatpush1.bf16.msra.mxu0 0
    %1006 = vmatprep.mubr.bf16.mxu0 0
    %1007 = vmatmul.mubr.bf16.gmra.mrb[0].mxu0 %v968
    %v1008 = vpop.f32.mrb[0].mxu0
    %v1009 = vadd.f32 %v970, %v1008
    %v1010 = vpop.f32.mrb[0].mxu0
    %v1011 = vadd.f32 %v971, %v1010
    %v1012 = vpop.f32.mrb[0].mxu0
    %v1013 = vpop.f32.mrb[0].mxu0
    %1014 = vdwg.mxu0
    %1015 = vmatprep.subr.bf16.mxu0 %v219
    %1016 = vmatpush1.bf16.msra.mxu0 %v218
    %1017 = vmatprep.subr.bf16.mxu0 %v223
    %1018 = vmatpush1.bf16.msra.mxu0 %v222
    %1019 = vmatprep.subr.bf16.mxu0 %v227
    %1020 = vmatpush1.bf16.msra.mxu0 %v226
    %1021 = vmatprep.subr.bf16.mxu0 %v231
    %1022 = vmatpush1.bf16.msra.mxu0 %v230
    %1023 = vmatprep.subr.bf16.mxu0 %v235
    %1024 = vmatpush1.bf16.msra.mxu0 %v234
    %1025 = vmatprep.subr.bf16.mxu0 %v239
    %1026 = vmatpush1.bf16.msra.mxu0 %v238
    %1027 = vmatprep.subr.bf16.mxu0 %v243
    %1028 = vmatpush1.bf16.msra.mxu0 %v242
    %1029 = vmatprep.subr.bf16.mxu0 %v247
    %1030 = vmatpush1.bf16.msra.mxu0 %v246
    %1031 = vmatprep.subr.bf16.mxu0 0
    %1032 = vmatpush1.bf16.msra.mxu0 0
    %1033 = vmatprep.subr.bf16.mxu0 0
    %1034 = vmatpush1.bf16.msra.mxu0 0
    %1035 = vmatprep.subr.bf16.mxu0 0
    %1036 = vmatpush1.bf16.msra.mxu0 0
    %1037 = vmatprep.subr.bf16.mxu0 0
    %1038 = vmatpush1.bf16.msra.mxu0 0
    %1039 = vmatprep.subr.bf16.mxu0 0
    %1040 = vmatpush1.bf16.msra.mxu0 0
    %1041 = vmatprep.subr.bf16.mxu0 0
    %1042 = vmatpush1.bf16.msra.mxu0 0
    %1043 = vmatprep.subr.bf16.mxu0 0
    %1044 = vmatpush1.bf16.msra.mxu0 0
    %1045 = vmatprep.subr.bf16.mxu0 0
    %1046 = vmatpush1.bf16.msra.mxu0 0
    %1047 = vmatprep.mubr.bf16.mxu0 0
    %1048 = vmatmul.mubr.bf16.gmra.mrb[0].mxu0 %v968
    %v1049 = vpop.f32.mrb[0].mxu0
    %v1050 = vadd.f32 %v972, %v1049
    %v1051 = vpop.f32.mrb[0].mxu0
    %v1052 = vadd.f32 %v973, %v1051
    %v1053 = vpop.f32.mrb[0].mxu0
    %v1054 = vpop.f32.mrb[0].mxu0
    %1055 = vdwg.mxu0
    %v1056 = vxor.u32 %v1009, 2147483648
    %v1057 = vmul.f32 %v1056, 1.442695
    %v1058 = vpow.pop %v1057
    %v1059 = vadd.f32 %v1058, 1.0
    %v1060 = vrcp.pop %v1059
    %v1061 = vmul.f32 1.0, %v1060
    %v1062 = vxor.u32 %v1011, 2147483648
    %v1063 = vmul.f32 %v1062, 1.442695
    %v1064 = vpow.pop %v1063
    %v1065 = vadd.f32 %v1064, 1.0
    %v1066 = vrcp.pop %v1065
    %v1067 = vmul.f32 1.0, %v1066
    %v1068 = vtanh.pop %v1050
    %v1069 = vxor.u32 %v1052, 2147483648
    %v1070 = vmul.f32 %v1069, 1.442695
    %v1071 = vpow.pop %v1070
    %v1072 = vadd.f32 %v1071, 1.0
    %v1073 = vrcp.pop %v1072
    %v1074 = vmul.f32 1.0, %v1073
    %v1075 = vmul.f32 %v1067, %v961
    %v1076 = vmul.f32 %v1061, %v1068
    %v1077 = vadd.f32 %v1075, %v1076
    %v1078 = vtanh.pop %v1077
    %v1079 = vmul.f32 %v1074, %v1078
    %s1080 = scalar_lea.vmem [#allocation12], 48
    %1081 = vst [vmem:[%s1080] sm:$0xff] %v1079
    %s1082 = scalar_lea.vmem [#allocation13], 48
    %1083 = vst [vmem:[%s1082] sm:$0xff] %v1077
    %v1084 = vpack.c.bf16 %v1079, %v1079
    %s1085 = scalar_lea.vmem [#allocation4], 224
    %v1086 = vld [vmem:[%s1085] sm:$0xff]
    %v1087 = vld [vmem:[%s1085 + $0x8] sm:$0xff]
    %v1088 = vld [vmem:[%s1085 + $0x10] sm:$0xff]
    %v1089 = vld [vmem:[%s1085 + $0x18] sm:$0xff]
    %1090 = vmatprep.subr.bf16.mxu0 %v217
    %1091 = vmatpush1.bf16.msra.mxu0 %v216
    %1092 = vmatprep.subr.bf16.mxu0 %v221
    %1093 = vmatpush1.bf16.msra.mxu0 %v220
    %1094 = vmatprep.subr.bf16.mxu0 %v225
    %1095 = vmatpush1.bf16.msra.mxu0 %v224
    %1096 = vmatprep.subr.bf16.mxu0 %v229
    %1097 = vmatpush1.bf16.msra.mxu0 %v228
    %1098 = vmatprep.subr.bf16.mxu0 %v233
    %1099 = vmatpush1.bf16.msra.mxu0 %v232
    %1100 = vmatprep.subr.bf16.mxu0 %v237
    %1101 = vmatpush1.bf16.msra.mxu0 %v236
    %1102 = vmatprep.subr.bf16.mxu0 %v241
    %1103 = vmatpush1.bf16.msra.mxu0 %v240
    %1104 = vmatprep.subr.bf16.mxu0 %v245
    %1105 = vmatpush1.bf16.msra.mxu0 %v244
    %1106 = vmatprep.subr.bf16.mxu0 0
    %1107 = vmatpush1.bf16.msra.mxu0 0
    %1108 = vmatprep.subr.bf16.mxu0 0
    %1109 = vmatpush1.bf16.msra.mxu0 0
    %1110 = vmatprep.subr.bf16.mxu0 0
    %1111 = vmatpush1.bf16.msra.mxu0 0
    %1112 = vmatprep.subr.bf16.mxu0 0
    %1113 = vmatpush1.bf16.msra.mxu0 0
    %1114 = vmatprep.subr.bf16.mxu0 0
    %1115 = vmatpush1.bf16.msra.mxu0 0
    %1116 = vmatprep.subr.bf16.mxu0 0
    %1117 = vmatpush1.bf16.msra.mxu0 0
    %1118 = vmatprep.subr.bf16.mxu0 0
    %1119 = vmatpush1.bf16.msra.mxu0 0
    %1120 = vmatprep.subr.bf16.mxu0 0
    %1121 = vmatpush1.bf16.msra.mxu0 0
    %1122 = vmatprep.mubr.bf16.mxu0 0
    %1123 = vmatmul.mubr.bf16.gmra.mrb[0].mxu0 %v1084
    %v1124 = vpop.f32.mrb[0].mxu0
    %v1125 = vadd.f32 %v1086, %v1124
    %v1126 = vpop.f32.mrb[0].mxu0
    %v1127 = vadd.f32 %v1087, %v1126
    %v1128 = vpop.f32.mrb[0].mxu0
    %v1129 = vpop.f32.mrb[0].mxu0
    %1130 = vdwg.mxu0
    %1131 = vmatprep.subr.bf16.mxu0 %v219
    %1132 = vmatpush1.bf16.msra.mxu0 %v218
    %1133 = vmatprep.subr.bf16.mxu0 %v223
    %1134 = vmatpush1.bf16.msra.mxu0 %v222
    %1135 = vmatprep.subr.bf16.mxu0 %v227
    %1136 = vmatpush1.bf16.msra.mxu0 %v226
    %1137 = vmatprep.subr.bf16.mxu0 %v231
    %1138 = vmatpush1.bf16.msra.mxu0 %v230
    %1139 = vmatprep.subr.bf16.mxu0 %v235
    %1140 = vmatpush1.bf16.msra.mxu0 %v234
    %1141 = vmatprep.subr.bf16.mxu0 %v239
    %1142 = vmatpush1.bf16.msra.mxu0 %v238
    %1143 = vmatprep.subr.bf16.mxu0 %v243
    %1144 = vmatpush1.bf16.msra.mxu0 %v242
    %1145 = vmatprep.subr.bf16.mxu0 %v247
    %1146 = vmatpush1.bf16.msra.mxu0 %v246
    %1147 = vmatprep.subr.bf16.mxu0 0
    %1148 = vmatpush1.bf16.msra.mxu0 0
    %1149 = vmatprep.subr.bf16.mxu0 0
    %1150 = vmatpush1.bf16.msra.mxu0 0
    %1151 = vmatprep.subr.bf16.mxu0 0
    %1152 = vmatpush1.bf16.msra.mxu0 0
    %1153 = vmatprep.subr.bf16.mxu0 0
    %1154 = vmatpush1.bf16.msra.mxu0 0
    %1155 = vmatprep.subr.bf16.mxu0 0
    %1156 = vmatpush1.bf16.msra.mxu0 0
    %1157 = vmatprep.subr.bf16.mxu0 0
    %1158 = vmatpush1.bf16.msra.mxu0 0
    %1159 = vmatprep.subr.bf16.mxu0 0
    %1160 = vmatpush1.bf16.msra.mxu0 0
    %1161 = vmatprep.subr.bf16.mxu0 0
    %1162 = vmatpush1.bf16.msra.mxu0 0
    %1163 = vmatprep.mubr.bf16.mxu0 0
    %1164 = vmatmul.mubr.bf16.gmra.mrb[0].mxu0 %v1084
    %v1165 = vpop.f32.mrb[0].mxu0
    %v1166 = vadd.f32 %v1088, %v1165
    %v1167 = vpop.f32.mrb[0].mxu0
    %v1168 = vadd.f32 %v1089, %v1167
    %v1169 = vpop.f32.mrb[0].mxu0
    %v1170 = vpop.f32.mrb[0].mxu0
    %1171 = vdwg.mxu0
    %v1172 = vxor.u32 %v1125, 2147483648
    %v1173 = vmul.f32 %v1172, 1.442695
    %v1174 = vpow.pop %v1173
    %v1175 = vadd.f32 %v1174, 1.0
    %v1176 = vrcp.pop %v1175
    %v1177 = vmul.f32 1.0, %v1176
    %v1178 = vxor.u32 %v1127, 2147483648
    %v1179 = vmul.f32 %v1178, 1.442695
    %v1180 = vpow.pop %v1179
    %v1181 = vadd.f32 %v1180, 1.0
    %v1182 = vrcp.pop %v1181
    %v1183 = vmul.f32 1.0, %v1182
    %v1184 = vtanh.pop %v1166
    %v1185 = vxor.u32 %v1168, 2147483648
    %v1186 = vmul.f32 %v1185, 1.442695
    %v1187 = vpow.pop %v1186
    %v1188 = vadd.f32 %v1187, 1.0
    %v1189 = vrcp.pop %v1188
    %v1190 = vmul.f32 1.0, %v1189
    %v1191 = vmul.f32 %v1183, %v1077
    %v1192 = vmul.f32 %v1177, %v1184
    %v1193 = vadd.f32 %v1191, %v1192
    %v1194 = vtanh.pop %v1193
    %v1195 = vmul.f32 %v1190, %v1194
    %s1196 = scalar_lea.vmem [#allocation12], 56
    %1197 = vst [vmem:[%s1196] sm:$0xff] %v1195
    %s1198 = scalar_lea.vmem [#allocation13], 56
    %1199 = vst [vmem:[%s1198] sm:$0xff] %v1193
    %1200 = vst [vmem:[#allocation2] sm:$0xff] %v1195
    %1201 = vst [vmem:[#allocation3] sm:$0xff] %v1193
    // Predicated region
    $region38: #{language_encoding_lstm_sequence.1} parent=1 // pred_check
      _
    $region39: #{language_encoding_lstm_sequence.1} parent=1 // pred_check_branch
      %1203 = sbr.rel (0) target = $region41
    $region40: #{language_encoding_lstm_sequence.1} parent=1 // pred_region
      %s1205 = ssub.s32 1024, 1024
      %1206 = vsyncadd [#allocation6], %s1205
      %s1207 = sshll.u32 [#allocation12], 4
      %s1208 = int_to_ptr.vmem [resolvable:$true] %s1207
      %1213 = dma.vmem_to_hbm [thread:$0]  %s1208, 1024, %s4, [#allocation6], 128, 128, 8
    $region41: #{language_encoding_lstm_sequence.1} parent=1 // pred_fallthru
      _
    // Predicated region
    $region42: #{language_encoding_lstm_sequence.1} parent=1 // pred_check
      _
    $region43: #{language_encoding_lstm_sequence.1} parent=1 // pred_check_branch
      %1215 = sbr.rel (0) target = $region45
    $region44: #{language_encoding_lstm_sequence.1} parent=1 // pred_region
      %s1217 = ssub.s32 1024, 1024
      %1218 = vsyncadd [#allocation14], %s1217
      %s1219 = sshll.u32 [#allocation13], 4
      %s1220 = int_to_ptr.vmem [resolvable:$true] %s1219
      %1225 = dma.vmem_to_hbm [thread:$0]  %s1220, 1024, %s5, [#allocation14], 128, 128, 8
    $region45: #{language_encoding_lstm_sequence.1} parent=1 // pred_fallthru
      _
    // Predicated region
    $region46: #{language_encoding_lstm_sequence.1} parent=1 // pred_check
      _
    $region47: #{language_encoding_lstm_sequence.1} parent=1 // pred_check_branch
      %1227 = sbr.rel (0) target = $region49
    $region48: #{language_encoding_lstm_sequence.1} parent=1 // pred_region
      %1228 = dma.done [#allocation6], 1024
    $region49: #{language_encoding_lstm_sequence.1} parent=1 // pred_fallthru
      _
    // Predicated region
    $region50: #{language_encoding_lstm_sequence.1} parent=1 // pred_check
      _
    $region51: #{language_encoding_lstm_sequence.1} parent=1 // pred_check_branch
      %1230 = sbr.rel (0) target = $region53
    $region52: #{language_encoding_lstm_sequence.1} parent=1 // pred_region
      %1231 = dma.done [#allocation14], 1024
    $region53: #{language_encoding_lstm_sequence.1} parent=1 // pred_fallthru
      _
    %1232 = vsyncpa [#allocation5], 1
    %1233 = vsyncpa [#allocation8], 1
    %1234 = vsyncpa [#allocation11], 1
    %1235 = vsyncpa [#allocation6], 1
    %1236 = vsyncpa [#allocation14], 1

</llo_original>
